<compile_context>
chip_gen: v6e
topology: v6e:2x2x1
jax: 0.10.0
libtpu: 0.0.40
codegen_flags: <defaults>
</compile_context>

<pallas_src>
import functools

import jax
import jax.numpy as jnp
import numpy as np
from jax.experimental import pallas as pl
from jax.experimental.pallas import tpu as pltpu

KERNEL_SIZE = 11
SIGMA = 1.5
PAD = (KERNEL_SIZE - 1) // 2
K1 = 0.01
K2 = 0.03
NUM_FIELDS = 5  # x, y, x*x, y*y, x*y


def _round_up(n, m):
    return -(-n // m) * m


def _gaussian_1d(kernel_size=KERNEL_SIZE, sigma=SIGMA):
    # matches torchmetrics _gaussian()
    dist = np.arange((1 - kernel_size) / 2.0, (1 + kernel_size) / 2.0, 1.0,
                     dtype=np.float32)
    g = np.exp(-np.square(dist / sigma) / 2.0)
    return (g / g.sum()).astype(np.float32)


def _conv_matrix(padded_len, out_len, g, offset=0):
    # M[offset + j + v, j] = g[v]  ->  (padded @ M)[j] = 'valid' cross-corr at j+offset.
    # offset=PAD folds the SSIM-map border crop directly into the conv matrix.
    k = g.shape[0]
    idx = np.arange(padded_len)[:, None] - np.arange(out_len)[None, :] - offset
    valid = (idx >= 0) & (idx < k)
    return np.where(valid, g[np.clip(idx, 0, k - 1)], 0.0).astype(np.float32)


def _reflect_matrix(n, pad):
    # R (n+2*pad, n): padded = R @ orig, PyTorch/jnp 'reflect' semantics (edge not repeated).
    idx = np.abs(np.arange(-pad, n + pad))
    idx = np.where(idx >= n, 2 * (n - 1) - idx, idx)
    R = np.zeros((n + 2 * pad, n), np.float32)
    R[np.arange(n + 2 * pad), idx] = 1.0
    return R


def _build_conv_constants(H, W):
    """Row/col Gaussian-blur matrices with reflect-pad AND border-crop folded in."""
    g = _gaussian_1d()
    Hp, Wp = H + 2 * PAD, W + 2 * PAD
    Hc, Wc = H - 2 * PAD, W - 2 * PAD
    rowT = _conv_matrix(Hp, Hc, g, offset=PAD).T        # (Hc, Hp)  crop folded in
    col = _conv_matrix(Wp, Wc, g, offset=PAD)           # (Wp, Wc)  crop folded in
    rowTc = rowT @ _reflect_matrix(H, PAD)              # (Hc, H)   reflect folded in
    colc = _reflect_matrix(W, PAD).T @ col               # (W, Wc)   reflect folded in
    return rowTc.astype(np.float32), colc.astype(np.float32)


def _prepare(x, y, station_mask, mask_2d):
    """Mask, compute data_range (torchmetrics tuple semantics), clamp. No padding."""
    B, C, H, W = x.shape
    assert C == 1
    x = x.astype(jnp.float32)[:, 0]
    y = y.astype(jnp.float32)[:, 0]
    sm = station_mask.astype(jnp.float32)[:, 0]
    m2d = mask_2d.astype(jnp.float32)[None]

    valid = ((m2d == 1.0) & (sm == 0.0)).astype(jnp.float32)
    xm = x * valid
    ym = y * valid

    min_val = jnp.min(ym)
    max_val = jnp.max(ym)
    # torchmetrics: data_range given as (min, max) tuple -> clamp both, range = max - min.
    # (If the masked target is constant, range==0 and SSIM is NaN -- same as torchmetrics.)
    xm = jnp.clip(xm, min_val, max_val)
    ym = jnp.clip(ym, min_val, max_val)
    dr = max_val - min_val
    consts = jnp.stack([(K1 * dr) ** 2, (K2 * dr) ** 2]).astype(jnp.float32)
    return xm, ym, consts


def _make_ssim_kernel(B, H, Hc, HP):
    def kernel(consts_ref, x_ref, y_ref, rowTc_ref, colc_ref, out_ref, s_ref):
        c1 = consts_ref[0]
        c2 = consts_ref[1]
        inv_n = consts_ref[2]          # 1 / (Hc * Wc)

        if HP != H:                     # static: only emitted if H is not 8-aligned
            s_ref[...] = jnp.zeros_like(s_ref)

        # Five blur fields per sample, stacked along sublanes at an 8-aligned
        # pitch HP, written straight into VMEM scratch (no concatenate copy).
        for b in range(B):
            x = x_ref[b]                # (H, W)
            y = y_ref[b]
            base = b * NUM_FIELDS * HP
            s_ref[base + 0 * HP:base + 0 * HP + H, :] = x
            s_ref[base + 1 * HP:base + 1 * HP + H, :] = y
            s_ref[base + 2 * HP:base + 2 * HP + H, :] = x * x
            s_ref[base + 3 * HP:base + 3 * HP + H, :] = y * y
            s_ref[base + 4 * HP:base + 4 * HP + H, :] = x * y

        # ONE fused MXU matmul: shared column conv (reflect-pad + crop folded in)
        # over the whole (B*5*HP, W) stack -> (B*5*HP, Wc).
        colc = colc_ref[...]            # (W, Wc)
        r = jnp.dot(s_ref[...], colc, preferred_element_type=jnp.float32)

        rowTc = rowTc_ref[...]          # (Hc, H), shared across fields & samples
        for b in range(B):
            base = b * NUM_FIELDS * HP

            def rowblur(f, base=base):
                blk = r[base + f * HP:base + f * HP + H]     # group-aligned slice
                return jnp.dot(rowTc, blk, preferred_element_type=jnp.float32)

            mu_x, mu_y = rowblur(0), rowblur(1)
            mu_xx, mu_yy, mu_xy = rowblur(2), rowblur(3), rowblur(4)

            mu_x2 = mu_x * mu_x
            mu_y2 = mu_y * mu_y
            mu_xym = mu_x * mu_y
            sig_x = mu_xx - mu_x2
            sig_y = mu_yy - mu_y2
            sig_xy = mu_xy - mu_xym

            num = (2.0 * mu_xym + c1) * (2.0 * sig_xy + c2)
            den = (mu_x2 + mu_y2 + c1) * (sig_x + sig_y + c2)
            # exact f32 divide keeps rtol=1e-4/atol=1e-5 parity with the reference
            ssim_map = num / den                             # (Hc, Wc)

            # mean over the already-cropped map; scalar -> SMEM (no masked vst)
            out_ref[b, 0] = jnp.sum(ssim_map) * inv_n

    return kernel


@functools.partial(jax.jit, static_argnames=("reduction",))
def masked_ssim(x, y, station_mask, mask_2d, reduction='elementwise_mean'):
    B, C, H, W = x.shape
    assert C == 1
    Hc, Wc = H - 2 * PAD, W - 2 * PAD      # torchmetrics crops PAD off the SSIM map
    HP = _round_up(H, 8)                   # sublane pitch of the stacked fields

    xm, ym, consts = _prepare(x, y, station_mask, mask_2d)

    rowTc_np, colc_np = _build_conv_constants(H, W)
    rowTc = jnp.asarray(rowTc_np)          # (Hc, H)
    colc = jnp.asarray(colc_np)            # (W, Wc)

    inv_n = np.float32(1.0 / (Hc * Wc))
    consts = jnp.concatenate([consts, jnp.full((1,), inv_n, jnp.float32)])

    per_sample = pl.pallas_call(
        _make_ssim_kernel(B, H, Hc, HP),
        out_shape=jax.ShapeDtypeStruct((B, 1), jnp.float32),
        grid_spec=pltpu.PrefetchScalarGridSpec(
            num_scalar_prefetch=0,
            grid=(1,),  # all samples in one step: demo size is overhead-bound
            in_specs=[
                pl.BlockSpec(memory_space=pltpu.MemorySpace.SMEM),    # c1, c2, 1/N
                pl.BlockSpec((B, H, W), lambda i: (0, 0, 0)),          # masked pred
                pl.BlockSpec((B, H, W), lambda i: (0, 0, 0)),          # masked target
                pl.BlockSpec((Hc, H), lambda i: (0, 0)),               # rowTc (const)
                pl.BlockSpec((W, Wc), lambda i: (0, 0)),               # colc  (const)
            ],
            out_specs=pl.BlockSpec((B, 1), lambda i: (0, 0),
                                   memory_space=pltpu.MemorySpace.SMEM),
            scratch_shapes=[pltpu.VMEM((B * NUM_FIELDS * HP, W), jnp.float32)],
        ),
        compiler_params=pltpu.CompilerParams(
            dimension_semantics=("arbitrary",)),
    )(consts, xm, ym, rowTc, colc)

    per_sample = per_sample[:, 0]
    if reduction == 'elementwise_mean':
        return jnp.mean(per_sample)
    return per_sample


def masked_ssim_ref(x, y, station_mask, mask_2d, reduction='elementwise_mean'):
    """Pure-JAX mirror (explicit reflect pad + full-res blur + explicit crop) used to
    validate the Pallas kernel, including the fold of reflect-pad/crop into the
    conv matrices and the restructured matmuls."""
    B, C, H, W = x.shape
    xm, ym, consts = _prepare(x, y, station_mask, mask_2d)
    c1, c2 = consts[0], consts[1]
    Hp, Wp = H + 2 * PAD, W + 2 * PAD
    g = _gaussian_1d()
    rowT = jnp.asarray(_conv_matrix(Hp, H, g).T)   # (H, Hp)
    col = jnp.asarray(_conv_matrix(Wp, W, g))      # (Wp, W)

    xp = jnp.pad(xm, ((0, 0), (PAD, PAD), (PAD, PAD)), mode='reflect')
    yp = jnp.pad(ym, ((0, 0), (PAD, PAD), (PAD, PAD)), mode='reflect')

    def blur(img):
        return jnp.einsum('hp,bpq,qw->bhw', rowT, img, col,
                          precision=jax.lax.Precision.HIGHEST)

    mu_x, mu_y = blur(xp), blur(yp)
    mu_xx, mu_yy, mu_xy = blur(xp * xp), blur(yp * yp), blur(xp * yp)
    mu_x2, mu_y2, mu_xym = mu_x * mu_x, mu_y * mu_y, mu_x * mu_y
    sig_x, sig_y, sig_xy = mu_xx - mu_x2, mu_yy - mu_y2, mu_xy - mu_xym
    ssim_map = ((2 * mu_xym + c1) * (2 * sig_xy + c2)) / \
               ((mu_x2 + mu_y2 + c1) * (sig_x + sig_y + c2))
    inner = ssim_map[:, PAD:H - PAD, PAD:W - PAD]
    per_sample = jnp.mean(inner.reshape(inner.shape[0], -1), axis=-1)
    if reduction == 'elementwise_mean':
        return jnp.mean(per_sample)
    return per_sample


if __name__ == "__main__":
    key = jax.random.PRNGKey(0)
    B, C, H, W = 2, 1, 32, 32
    kx, ky, ks = jax.random.split(key, 3)

    x = jax.random.normal(kx, (B, C, H, W), dtype=jnp.float32)
    y = jax.random.normal(ky, (B, C, H, W), dtype=jnp.float32)
    # deterministic NY-style region mask: 1 inside a centered box, 0 outside
    rows = jnp.arange(H)[:, None]
    cols = jnp.arange(W)[None, :]
    mask_2d = ((rows >= 4) & (rows < 28) & (cols >= 4) & (cols < 28)).astype(jnp.float32)
    # sparse station mask
    station_mask = (jax.random.uniform(ks, (B, C, H, W)) < 0.05).astype(jnp.float32)

    out = masked_ssim(x, y, station_mask, mask_2d)
    out = jax.block_until_ready(out)

    ref = jax.block_until_ready(masked_ssim_ref(x, y, station_mask, mask_2d))
    np.testing.assert_allclose(np.asarray(out), np.asarray(ref), rtol=1e-4, atol=1e-5)
    assert np.isfinite(float(out))
    print("KERNEL_OK")
</pallas_src>

<mosaic_0001>
module attributes {stable_mosaic.version = 11 : i64} {
  func.func @kernel(%arg0: i32, %arg1: memref<3xf32, #tpu.memory_space<smem>>, %arg2: memref<2x32x32xf32, #tpu.memory_space<vmem>>, %arg3: memref<2x32x32xf32, #tpu.memory_space<vmem>>, %arg4: memref<22x32xf32, #tpu.memory_space<vmem>>, %arg5: memref<32x22xf32, #tpu.memory_space<vmem>>, %arg6: memref<2x1xf32, #tpu.memory_space<smem>>, %arg7: memref<320x32xf32, #tpu.memory_space<vmem>>) attributes {dimension_semantics = [#tpu.dimension_semantics<arbitrary>], iteration_bounds = array<i64: 1>, scalar_prefetch = 0 : i64, scratch_operands = 1 : i64, tpu.core_type = #tpu.core_type<tc>, window_params = [{transform_indices = @transform_0, window_bounds = array<i64: 3>}, {pipeline_mode = #tpu.pipeline_mode<synchronous>, transform_indices = @transform_1, window_bounds = array<i64: 2, 32, 32>}, {pipeline_mode = #tpu.pipeline_mode<synchronous>, transform_indices = @transform_2, window_bounds = array<i64: 2, 32, 32>}, {pipeline_mode = #tpu.pipeline_mode<synchronous>, transform_indices = @transform_3, window_bounds = array<i64: 22, 32>}, {pipeline_mode = #tpu.pipeline_mode<synchronous>, transform_indices = @transform_4, window_bounds = array<i64: 32, 22>}, {transform_indices = @transform_5, window_bounds = array<i64: 2, 1>}]} {
    %c0 = arith.constant 0 : index
    %0 = memref.load %arg1[%c0] : memref<3xf32, #tpu.memory_space<smem>>
    %c1 = arith.constant 1 : index
    %1 = memref.load %arg1[%c1] : memref<3xf32, #tpu.memory_space<smem>>
    %c2 = arith.constant 2 : index
    %2 = memref.load %arg1[%c2] : memref<3xf32, #tpu.memory_space<smem>>
    %c0_0 = arith.constant 0 : index
    %c0_1 = arith.constant 0 : index
    %c0_2 = arith.constant 0 : index
    %3 = vector.load %arg2[%c0_0, %c0_1, %c0_2] : memref<2x32x32xf32, #tpu.memory_space<vmem>>, vector<1x32x32xf32>
    %4 = vector.shape_cast %3 : vector<1x32x32xf32> to vector<32x32xf32>
    %c0_3 = arith.constant 0 : index
    %c0_4 = arith.constant 0 : index
    %c0_5 = arith.constant 0 : index
    %5 = vector.load %arg3[%c0_3, %c0_4, %c0_5] : memref<2x32x32xf32, #tpu.memory_space<vmem>>, vector<1x32x32xf32>
    %6 = vector.shape_cast %5 : vector<1x32x32xf32> to vector<32x32xf32>
    %c0_6 = arith.constant 0 : index
    %c0_7 = arith.constant 0 : index
    %7 = vector.load %arg7[%c0_6, %c0_7] : memref<320x32xf32, #tpu.memory_space<vmem>>, vector<32x32xf32>
    tpu.vector_store %arg7[%c0_6, %c0_7], %4 {strides = array<i32>} : memref<320x32xf32, #tpu.memory_space<vmem>>, vector<32x32xf32>,
    %c32 = arith.constant 32 : index
    %c0_8 = arith.constant 0 : index
    %8 = vector.load %arg7[%c32, %c0_8] : memref<320x32xf32, #tpu.memory_space<vmem>>, vector<32x32xf32>
    tpu.vector_store %arg7[%c32, %c0_8], %6 {strides = array<i32>} : memref<320x32xf32, #tpu.memory_space<vmem>>, vector<32x32xf32>,
    %9 = arith.mulf %4, %4 : vector<32x32xf32>
    %c64 = arith.constant 64 : index
    %c0_9 = arith.constant 0 : index
    %10 = vector.load %arg7[%c64, %c0_9] : memref<320x32xf32, #tpu.memory_space<vmem>>, vector<32x32xf32>
    tpu.vector_store %arg7[%c64, %c0_9], %9 {strides = array<i32>} : memref<320x32xf32, #tpu.memory_space<vmem>>, vector<32x32xf32>,
    %11 = arith.mulf %6, %6 : vector<32x32xf32>
    %c96 = arith.constant 96 : index
    %c0_10 = arith.constant 0 : index
    %12 = vector.load %arg7[%c96, %c0_10] : memref<320x32xf32, #tpu.memory_space<vmem>>, vector<32x32xf32>
    tpu.vector_store %arg7[%c96, %c0_10], %11 {strides = array<i32>} : memref<320x32xf32, #tpu.memory_space<vmem>>, vector<32x32xf32>,
    %13 = arith.mulf %4, %6 : vector<32x32xf32>
    %c128 = arith.constant 128 : index
    %c0_11 = arith.constant 0 : index
    %14 = vector.load %arg7[%c128, %c0_11] : memref<320x32xf32, #tpu.memory_space<vmem>>, vector<32x32xf32>
    tpu.vector_store %arg7[%c128, %c0_11], %13 {strides = array<i32>} : memref<320x32xf32, #tpu.memory_space<vmem>>, vector<32x32xf32>,
    %c1_12 = arith.constant 1 : index
    %c0_13 = arith.constant 0 : index
    %c0_14 = arith.constant 0 : index
    %15 = vector.load %arg2[%c1_12, %c0_13, %c0_14] : memref<2x32x32xf32, #tpu.memory_space<vmem>>, vector<1x32x32xf32>
    %16 = vector.shape_cast %15 : vector<1x32x32xf32> to vector<32x32xf32>
    %c1_15 = arith.constant 1 : index
    %c0_16 = arith.constant 0 : index
    %c0_17 = arith.constant 0 : index
    %17 = vector.load %arg3[%c1_15, %c0_16, %c0_17] : memref<2x32x32xf32, #tpu.memory_space<vmem>>, vector<1x32x32xf32>
    %18 = vector.shape_cast %17 : vector<1x32x32xf32> to vector<32x32xf32>
    %c160 = arith.constant 160 : index
    %c0_18 = arith.constant 0 : index
    %19 = vector.load %arg7[%c160, %c0_18] : memref<320x32xf32, #tpu.memory_space<vmem>>, vector<32x32xf32>
    tpu.vector_store %arg7[%c160, %c0_18], %16 {strides = array<i32>} : memref<320x32xf32, #tpu.memory_space<vmem>>, vector<32x32xf32>,
    %c192 = arith.constant 192 : index
    %c0_19 = arith.constant 0 : index
    %20 = vector.load %arg7[%c192, %c0_19] : memref<320x32xf32, #tpu.memory_space<vmem>>, vector<32x32xf32>
    tpu.vector_store %arg7[%c192, %c0_19], %18 {strides = array<i32>} : memref<320x32xf32, #tpu.memory_space<vmem>>, vector<32x32xf32>,
    %21 = arith.mulf %16, %16 : vector<32x32xf32>
    %c224 = arith.constant 224 : index
    %c0_20 = arith.constant 0 : index
    %22 = vector.load %arg7[%c224, %c0_20] : memref<320x32xf32, #tpu.memory_space<vmem>>, vector<32x32xf32>
    tpu.vector_store %arg7[%c224, %c0_20], %21 {strides = array<i32>} : memref<320x32xf32, #tpu.memory_space<vmem>>, vector<32x32xf32>,
    %23 = arith.mulf %18, %18 : vector<32x32xf32>
    %c256 = arith.constant 256 : index
    %c0_21 = arith.constant 0 : index
    %24 = vector.load %arg7[%c256, %c0_21] : memref<320x32xf32, #tpu.memory_space<vmem>>, vector<32x32xf32>
    tpu.vector_store %arg7[%c256, %c0_21], %23 {strides = array<i32>} : memref<320x32xf32, #tpu.memory_space<vmem>>, vector<32x32xf32>,
    %25 = arith.mulf %16, %18 : vector<32x32xf32>
    %c288 = arith.constant 288 : index
    %c0_22 = arith.constant 0 : index
    %26 = vector.load %arg7[%c288, %c0_22] : memref<320x32xf32, #tpu.memory_space<vmem>>, vector<32x32xf32>
    tpu.vector_store %arg7[%c288, %c0_22], %25 {strides = array<i32>} : memref<320x32xf32, #tpu.memory_space<vmem>>, vector<32x32xf32>,
    %c0_23 = arith.constant 0 : index
    %c0_24 = arith.constant 0 : index
    %27 = vector.load %arg5[%c0_23, %c0_24] : memref<32x22xf32, #tpu.memory_space<vmem>>, vector<32x22xf32>
    %c0_25 = arith.constant 0 : index
    %c0_26 = arith.constant 0 : index
    %28 = vector.load %arg7[%c0_25, %c0_26] : memref<320x32xf32, #tpu.memory_space<vmem>>, vector<320x32xf32>
    %cst = arith.constant dense<0.000000e+00> : vector<320x22xf32>
    %29 = tpu.matmul %28, %27, %cst {dimension_numbers = #tpu.dot_dimension_numbers<[1], [0], [0], [1], [0, 0, 1, 1], [], []>} : vector<320x32xf32>, vector<32x22xf32>, vector<320x22xf32> -> vector<320x22xf32>
    %c0_27 = arith.constant 0 : index
    %c0_28 = arith.constant 0 : index
    %30 = vector.load %arg4[%c0_27, %c0_28] : memref<22x32xf32, #tpu.memory_space<vmem>>, vector<22x32xf32>
    %31 = vector.extract_strided_slice %29 {offsets = [0, 0], sizes = [32, 22], strides = [1, 1]} : vector<320x22xf32> to vector<32x22xf32>
    %cst_29 = arith.constant dense<0.000000e+00> : vector<22x22xf32>
    %32 = tpu.matmul %30, %31, %cst_29 {dimension_numbers = #tpu.dot_dimension_numbers<[1], [0], [0], [1], [0, 0, 1, 1], [], []>} : vector<22x32xf32>, vector<32x22xf32>, vector<22x22xf32> -> vector<22x22xf32>
    %33 = vector.extract_strided_slice %29 {offsets = [32, 0], sizes = [32, 22], strides = [1, 1]} : vector<320x22xf32> to vector<32x22xf32>
    %cst_30 = arith.constant dense<0.000000e+00> : vector<22x22xf32>
    %34 = tpu.matmul %30, %33, %cst_30 {dimension_numbers = #tpu.dot_dimension_numbers<[1], [0], [0], [1], [0, 0, 1, 1], [], []>} : vector<22x32xf32>, vector<32x22xf32>, vector<22x22xf32> -> vector<22x22xf32>
    %35 = vector.extract_strided_slice %29 {offsets = [64, 0], sizes = [32, 22], strides = [1, 1]} : vector<320x22xf32> to vector<32x22xf32>
    %cst_31 = arith.constant dense<0.000000e+00> : vector<22x22xf32>
    %36 = tpu.matmul %30, %35, %cst_31 {dimension_numbers = #tpu.dot_dimension_numbers<[1], [0], [0], [1], [0, 0, 1, 1], [], []>} : vector<22x32xf32>, vector<32x22xf32>, vector<22x22xf32> -> vector<22x22xf32>
    %37 = vector.extract_strided_slice %29 {offsets = [96, 0], sizes = [32, 22], strides = [1, 1]} : vector<320x22xf32> to vector<32x22xf32>
    %cst_32 = arith.constant dense<0.000000e+00> : vector<22x22xf32>
    %38 = tpu.matmul %30, %37, %cst_32 {dimension_numbers = #tpu.dot_dimension_numbers<[1], [0], [0], [1], [0, 0, 1, 1], [], []>} : vector<22x32xf32>, vector<32x22xf32>, vector<22x22xf32> -> vector<22x22xf32>
    %39 = vector.extract_strided_slice %29 {offsets = [128, 0], sizes = [32, 22], strides = [1, 1]} : vector<320x22xf32> to vector<32x22xf32>
    %cst_33 = arith.constant dense<0.000000e+00> : vector<22x22xf32>
    %40 = tpu.matmul %30, %39, %cst_33 {dimension_numbers = #tpu.dot_dimension_numbers<[1], [0], [0], [1], [0, 0, 1, 1], [], []>} : vector<22x32xf32>, vector<32x22xf32>, vector<22x22xf32> -> vector<22x22xf32>
    %41 = arith.mulf %32, %32 : vector<22x22xf32>
    %42 = arith.mulf %34, %34 : vector<22x22xf32>
    %43 = arith.mulf %32, %34 : vector<22x22xf32>
    %44 = arith.subf %36, %41 : vector<22x22xf32>
    %45 = arith.subf %38, %42 : vector<22x22xf32>
    %46 = arith.subf %40, %43 : vector<22x22xf32>
    %cst_34 = arith.constant 2.000000e+00 : f32
    %47 = vector.broadcast %cst_34 : f32 to vector<22x22xf32>
    %48 = arith.mulf %47, %43 : vector<22x22xf32>
    %49 = vector.broadcast %0 : f32 to vector<22x22xf32>
    %50 = arith.addf %48, %49 : vector<22x22xf32>
    %cst_35 = arith.constant 2.000000e+00 : f32
    %51 = vector.broadcast %cst_35 : f32 to vector<22x22xf32>
    %52 = arith.mulf %51, %46 : vector<22x22xf32>
    %53 = vector.broadcast %1 : f32 to vector<22x22xf32>
    %54 = arith.addf %52, %53 : vector<22x22xf32>
    %55 = arith.mulf %50, %54 : vector<22x22xf32>
    %56 = arith.addf %41, %42 : vector<22x22xf32>
    %57 = vector.broadcast %0 : f32 to vector<22x22xf32>
    %58 = arith.addf %56, %57 : vector<22x22xf32>
    %59 = arith.addf %44, %45 : vector<22x22xf32>
    %60 = vector.broadcast %1 : f32 to vector<22x22xf32>
    %61 = arith.addf %59, %60 : vector<22x22xf32>
    %62 = arith.mulf %58, %61 : vector<22x22xf32>
    %63 = arith.divf %55, %62 : vector<22x22xf32>
    %64 = vector.shape_cast %63 : vector<22x22xf32> to vector<1x22x22xf32>
    %cst_36 = arith.constant dense<0.000000e+00> : vector<1xf32>
    %65 = vector.multi_reduction <add>, %64, %cst_36 [1, 2] : vector<1x22x22xf32> to vector<1xf32>
    %66 = vector.shape_cast %65 : vector<1xf32> to vector<1x1x1xf32>
    %67 = vector.extract %66[0, 0, 0] : f32 from vector<1x1x1xf32>
    %68 = arith.mulf %67, %2 : f32
    %c0_37 = arith.constant 0 : index
    %c0_38 = arith.constant 0 : index
    %69 = memref.load %arg6[%c0_37, %c0_38] : memref<2x1xf32, #tpu.memory_space<smem>>
    memref.store %68, %arg6[%c0_37, %c0_38] : memref<2x1xf32, #tpu.memory_space<smem>>
    %70 = vector.extract_strided_slice %29 {offsets = [160, 0], sizes = [32, 22], strides = [1, 1]} : vector<320x22xf32> to vector<32x22xf32>
    %cst_39 = arith.constant dense<0.000000e+00> : vector<22x22xf32>
    %71 = tpu.matmul %30, %70, %cst_39 {dimension_numbers = #tpu.dot_dimension_numbers<[1], [0], [0], [1], [0, 0, 1, 1], [], []>} : vector<22x32xf32>, vector<32x22xf32>, vector<22x22xf32> -> vector<22x22xf32>
    %72 = vector.extract_strided_slice %29 {offsets = [192, 0], sizes = [32, 22], strides = [1, 1]} : vector<320x22xf32> to vector<32x22xf32>
    %cst_40 = arith.constant dense<0.000000e+00> : vector<22x22xf32>
    %73 = tpu.matmul %30, %72, %cst_40 {dimension_numbers = #tpu.dot_dimension_numbers<[1], [0], [0], [1], [0, 0, 1, 1], [], []>} : vector<22x32xf32>, vector<32x22xf32>, vector<22x22xf32> -> vector<22x22xf32>
    %74 = vector.extract_strided_slice %29 {offsets = [224, 0], sizes = [32, 22], strides = [1, 1]} : vector<320x22xf32> to vector<32x22xf32>
    %cst_41 = arith.constant dense<0.000000e+00> : vector<22x22xf32>
    %75 = tpu.matmul %30, %74, %cst_41 {dimension_numbers = #tpu.dot_dimension_numbers<[1], [0], [0], [1], [0, 0, 1, 1], [], []>} : vector<22x32xf32>, vector<32x22xf32>, vector<22x22xf32> -> vector<22x22xf32>
    %76 = vector.extract_strided_slice %29 {offsets = [256, 0], sizes = [32, 22], strides = [1, 1]} : vector<320x22xf32> to vector<32x22xf32>
    %cst_42 = arith.constant dense<0.000000e+00> : vector<22x22xf32>
    %77 = tpu.matmul %30, %76, %cst_42 {dimension_numbers = #tpu.dot_dimension_numbers<[1], [0], [0], [1], [0, 0, 1, 1], [], []>} : vector<22x32xf32>, vector<32x22xf32>, vector<22x22xf32> -> vector<22x22xf32>
    %78 = vector.extract_strided_slice %29 {offsets = [288, 0], sizes = [32, 22], strides = [1, 1]} : vector<320x22xf32> to vector<32x22xf32>
    %cst_43 = arith.constant dense<0.000000e+00> : vector<22x22xf32>
    %79 = tpu.matmul %30, %78, %cst_43 {dimension_numbers = #tpu.dot_dimension_numbers<[1], [0], [0], [1], [0, 0, 1, 1], [], []>} : vector<22x32xf32>, vector<32x22xf32>, vector<22x22xf32> -> vector<22x22xf32>
    %80 = arith.mulf %71, %71 : vector<22x22xf32>
    %81 = arith.mulf %73, %73 : vector<22x22xf32>
    %82 = arith.mulf %71, %73 : vector<22x22xf32>
    %83 = arith.subf %75, %80 : vector<22x22xf32>
    %84 = arith.subf %77, %81 : vector<22x22xf32>
    %85 = arith.subf %79, %82 : vector<22x22xf32>
    %cst_44 = arith.constant 2.000000e+00 : f32
    %86 = vector.broadcast %cst_44 : f32 to vector<22x22xf32>
    %87 = arith.mulf %86, %82 : vector<22x22xf32>
    %88 = vector.broadcast %0 : f32 to vector<22x22xf32>
    %89 = arith.addf %87, %88 : vector<22x22xf32>
    %cst_45 = arith.constant 2.000000e+00 : f32
    %90 = vector.broadcast %cst_45 : f32 to vector<22x22xf32>
    %91 = arith.mulf %90, %85 : vector<22x22xf32>
    %92 = vector.broadcast %1 : f32 to vector<22x22xf32>
    %93 = arith.addf %91, %92 : vector<22x22xf32>
    %94 = arith.mulf %89, %93 : vector<22x22xf32>
    %95 = arith.addf %80, %81 : vector<22x22xf32>
    %96 = vector.broadcast %0 : f32 to vector<22x22xf32>
    %97 = arith.addf %95, %96 : vector<22x22xf32>
    %98 = arith.addf %83, %84 : vector<22x22xf32>
    %99 = vector.broadcast %1 : f32 to vector<22x22xf32>
    %100 = arith.addf %98, %99 : vector<22x22xf32>
    %101 = arith.mulf %97, %100 : vector<22x22xf32>
    %102 = arith.divf %94, %101 : vector<22x22xf32>
    %103 = vector.shape_cast %102 : vector<22x22xf32> to vector<1x22x22xf32>
    %cst_46 = arith.constant dense<0.000000e+00> : vector<1xf32>
    %104 = vector.multi_reduction <add>, %103, %cst_46 [1, 2] : vector<1x22x22xf32> to vector<1xf32>
    %105 = vector.shape_cast %104 : vector<1xf32> to vector<1x1x1xf32>
    %106 = vector.extract %105[0, 0, 0] : f32 from vector<1x1x1xf32>
    %107 = arith.mulf %106, %2 : f32
    %c1_47 = arith.constant 1 : index
    %c0_48 = arith.constant 0 : index
    %108 = memref.load %arg6[%c1_47, %c0_48] : memref<2x1xf32, #tpu.memory_space<smem>>
    memref.store %107, %arg6[%c1_47, %c0_48] : memref<2x1xf32, #tpu.memory_space<smem>>
    return
  }
  func.func @transform_0(%arg0: i32) -> i32 {
    %c0_i32 = arith.constant 0 : i32
    %c0_i32_0 = arith.constant 0 : i32
    return %c0_i32 : i32
  }
  func.func @transform_1(%arg0: i32) -> (i32, i32, i32) {
    %c0_i32 = arith.constant 0 : i32
    %c0_i32_0 = arith.constant 0 : i32
    %c0_i32_1 = arith.constant 0 : i32
    %c0_i32_2 = arith.constant 0 : i32
    return %c0_i32, %c0_i32_0, %c0_i32_1 : i32, i32, i32
  }
  func.func @transform_2(%arg0: i32) -> (i32, i32, i32) {
    %c0_i32 = arith.constant 0 : i32
    %c0_i32_0 = arith.constant 0 : i32
    %c0_i32_1 = arith.constant 0 : i32
    %c0_i32_2 = arith.constant 0 : i32
    return %c0_i32, %c0_i32_0, %c0_i32_1 : i32, i32, i32
  }
  func.func @transform_3(%arg0: i32) -> (i32, i32) {
    %c0_i32 = arith.constant 0 : i32
    %c0_i32_0 = arith.constant 0 : i32
    %c0_i32_1 = arith.constant 0 : i32
    return %c0_i32, %c0_i32_0 : i32, i32
  }
  func.func @transform_4(%arg0: i32) -> (i32, i32) {
    %c0_i32 = arith.constant 0 : i32
    %c0_i32_0 = arith.constant 0 : i32
    %c0_i32_1 = arith.constant 0 : i32
    return %c0_i32, %c0_i32_0 : i32, i32
  }
  func.func @transform_5(%arg0: i32) -> (i32, i32) {
    %c0_i32 = arith.constant 0 : i32
    %c0_i32_0 = arith.constant 0 : i32
    %c0_i32_1 = arith.constant 0 : i32
    return %c0_i32, %c0_i32_0 : i32, i32
  }
}

</mosaic_0001>

<llo_original>
// kernel: masked_ssim.1
$region0: #{masked_ssim.1}
  #allocation0 [shape = 'u32[]', space=smem, size = 0x4, offset = 0x4, fixed_abs, tag = 'smem constant byte address 0x4 - core index']
  #allocation1 [shape = 'u32[144,128]{1,0:T(1,128)}', space=vmem, size = 0x12000, scoped, tag = 'internal scratch']
  #allocation2 [shape = 'f32[320,32]{1,0:T(8,128)}', space=vmem, size = 0x28000, scoped, tag = 'scratch operand']
  %s0 = inlined_call_operand.vmem [shape: f32[3], index: 0, kind: input, shape index: {}]
  %s1 = inlined_call_operand.vmem [shape: f32[2,32,32], index: 1, kind: input, shape index: {}]
  %s2 = inlined_call_operand.vmem [shape: f32[2,32,32], index: 2, kind: input, shape index: {}]
  %s3 = inlined_call_operand.vmem [shape: f32[22,32], index: 3, kind: input, shape index: {}]
  %s4 = inlined_call_operand.vmem [shape: f32[32,22], index: 4, kind: input, shape index: {}]
  %s5 = inlined_call_operand.vmem [shape: f32[2,1], index: 5, kind: output, shape index: {}]
  %s6 = sld [smem:[#allocation0]]
  $region34: #{masked_ssim.1} parent=0
    _
  %s8 = ssub.s32 1, %s6
  %s9 = scalar_select 0, %s8, %s6
  $region1: #{masked_ssim.1} parent=0
    #allocation3 [shape = 'u8[512]{0}', space=smem, size = 0x200, scoped, tag = 'input window, operand 0, single buffered']
    #allocation4 [shape = 's32[1]{0}', space=sflag, size = 0x4, scoped, tag = 'scoped memory for masked_ssim.1']
    #allocation5 [shape = 's32[1]{0}', space=sflag, size = 0x4, scoped, tag = 'scoped memory for masked_ssim.1']
    #allocation6 [shape = 'u8[1024]{0}', space=smem, size = 0x400, scoped, tag = 'output window, operand 0, single buffered']
    %10 = vsyncpa [#allocation4], 0
    %11 = vsyncpa [#allocation5], 0
    // Predicated region
    $region2: #{masked_ssim.1} parent=1 // pred_check
      _
    $region3: #{masked_ssim.1} parent=1 // pred_check_branch
      %13 = sbr.rel (0) target = $region5
    $region4: #{masked_ssim.1} parent=1 // pred_region
      %s15 = ssub.s32 16, 16
      %16 = vsyncadd [#allocation4], %s15
      %s18 = sshll.u32 %s0, 4
      %s19 = int_to_ptr.vmem [resolvable:$true] %s18
      %21 = dma.vmem_to_smem %s19, 16, [#allocation3], [#allocation4]
    $region5: #{masked_ssim.1} parent=1 // pred_fallthru
      _
    // Predicated region
    $region6: #{masked_ssim.1} parent=1 // pred_check
      _
    $region7: #{masked_ssim.1} parent=1 // pred_check_branch
      %23 = sbr.rel (0) target = $region9
    $region8: #{masked_ssim.1} parent=1 // pred_region
      _
    $region9: #{masked_ssim.1} parent=1 // pred_fallthru
      _
    // Predicated region
    $region10: #{masked_ssim.1} parent=1 // pred_check
      _
    $region11: #{masked_ssim.1} parent=1 // pred_check_branch
      %25 = sbr.rel (0) target = $region13
    $region12: #{masked_ssim.1} parent=1 // pred_region
      _
    $region13: #{masked_ssim.1} parent=1 // pred_fallthru
      _
    // Predicated region
    $region14: #{masked_ssim.1} parent=1 // pred_check
      _
    $region15: #{masked_ssim.1} parent=1 // pred_check_branch
      %27 = sbr.rel (0) target = $region17
    $region16: #{masked_ssim.1} parent=1 // pred_region
      _
    $region17: #{masked_ssim.1} parent=1 // pred_fallthru
      _
    // Predicated region
    $region18: #{masked_ssim.1} parent=1 // pred_check
      _
    $region19: #{masked_ssim.1} parent=1 // pred_check_branch
      %29 = sbr.rel (0) target = $region21
    $region20: #{masked_ssim.1} parent=1 // pred_region
      _
    $region21: #{masked_ssim.1} parent=1 // pred_fallthru
      _
    // Predicated region
    $region22: #{masked_ssim.1} parent=1 // pred_check
      _
    $region23: #{masked_ssim.1} parent=1 // pred_check_branch
      %31 = sbr.rel (0) target = $region25
    $region24: #{masked_ssim.1} parent=1 // pred_region
      %32 = dma.done [#allocation4], 16
    $region25: #{masked_ssim.1} parent=1 // pred_fallthru
      _
    %33 = sfence
    %s34 = sld [smem:[#allocation3]]
    %s35 = sld [smem:[#allocation3 + $0x1]]
    %s36 = sld [smem:[#allocation3 + $0x2]]
    %v37 = vld [vmem:[%s1] sm:$0xff]
    %v38 = vld [vmem:[%s1 + $0x8] sm:$0xff]
    %v39 = vld [vmem:[%s1 + $0x10] sm:$0xff]
    %v40 = vld [vmem:[%s1 + $0x18] sm:$0xff]
    %v41 = vld [vmem:[%s2] sm:$0xff]
    %v42 = vld [vmem:[%s2 + $0x8] sm:$0xff]
    %v43 = vld [vmem:[%s2 + $0x10] sm:$0xff]
    %v44 = vld [vmem:[%s2 + $0x18] sm:$0xff]
    %vm45 = vcmask 261120
    %46 = vst.msk [vmem:[#allocation2] sm:$0xff] %vm45, %v37
    %47 = vst.msk [vmem:[#allocation2 + $0x8] sm:$0xff] %vm45, %v38
    %48 = vst.msk [vmem:[#allocation2 + $0x10] sm:$0xff] %vm45, %v39
    %49 = vst.msk [vmem:[#allocation2 + $0x18] sm:$0xff] %vm45, %v40
    %50 = vst.msk [vmem:[#allocation2 + $0x20] sm:$0xff] %vm45, %v41
    %51 = vst.msk [vmem:[#allocation2 + $0x28] sm:$0xff] %vm45, %v42
    %52 = vst.msk [vmem:[#allocation2 + $0x30] sm:$0xff] %vm45, %v43
    %53 = vst.msk [vmem:[#allocation2 + $0x38] sm:$0xff] %vm45, %v44
    %v54 = vmul.f32 %v37, %v37
    %v55 = vmul.f32 %v38, %v38
    %v56 = vmul.f32 %v39, %v39
    %v57 = vmul.f32 %v40, %v40
    %58 = vst.msk [vmem:[#allocation2 + $0x40] sm:$0xff] %vm45, %v54
    %59 = vst.msk [vmem:[#allocation2 + $0x48] sm:$0xff] %vm45, %v55
    %60 = vst.msk [vmem:[#allocation2 + $0x50] sm:$0xff] %vm45, %v56
    %61 = vst.msk [vmem:[#allocation2 + $0x58] sm:$0xff] %vm45, %v57
    %v62 = vmul.f32 %v41, %v41
    %v63 = vmul.f32 %v42, %v42
    %v64 = vmul.f32 %v43, %v43
    %v65 = vmul.f32 %v44, %v44
    %66 = vst.msk [vmem:[#allocation2 + $0x60] sm:$0xff] %vm45, %v62
    %67 = vst.msk [vmem:[#allocation2 + $0x68] sm:$0xff] %vm45, %v63
    %68 = vst.msk [vmem:[#allocation2 + $0x70] sm:$0xff] %vm45, %v64
    %69 = vst.msk [vmem:[#allocation2 + $0x78] sm:$0xff] %vm45, %v65
    %v70 = vmul.f32 %v37, %v41
    %v71 = vmul.f32 %v38, %v42
    %v72 = vmul.f32 %v39, %v43
    %v73 = vmul.f32 %v40, %v44
    %74 = vst.msk [vmem:[#allocation2 + $0x80] sm:$0xff] %vm45, %v70
    %75 = vst.msk [vmem:[#allocation2 + $0x88] sm:$0xff] %vm45, %v71
    %76 = vst.msk [vmem:[#allocation2 + $0x90] sm:$0xff] %vm45, %v72
    %77 = vst.msk [vmem:[#allocation2 + $0x98] sm:$0xff] %vm45, %v73
    %s78 = scalar_lea.vmem %s1, 32
    %v79 = vld [vmem:[%s78] sm:$0xff]
    %v80 = vld [vmem:[%s78 + $0x8] sm:$0xff]
    %v81 = vld [vmem:[%s78 + $0x10] sm:$0xff]
    %v82 = vld [vmem:[%s78 + $0x18] sm:$0xff]
    %s83 = scalar_lea.vmem %s2, 32
    %v84 = vld [vmem:[%s83] sm:$0xff]
    %v85 = vld [vmem:[%s83 + $0x8] sm:$0xff]
    %v86 = vld [vmem:[%s83 + $0x10] sm:$0xff]
    %v87 = vld [vmem:[%s83 + $0x18] sm:$0xff]
    %88 = vst.msk [vmem:[#allocation2 + $0xa0] sm:$0xff] %vm45, %v79
    %89 = vst.msk [vmem:[#allocation2 + $0xa8] sm:$0xff] %vm45, %v80
    %90 = vst.msk [vmem:[#allocation2 + $0xb0] sm:$0xff] %vm45, %v81
    %91 = vst.msk [vmem:[#allocation2 + $0xb8] sm:$0xff] %vm45, %v82
    %92 = vst.msk [vmem:[#allocation2 + $0xc0] sm:$0xff] %vm45, %v84
    %93 = vst.msk [vmem:[#allocation2 + $0xc8] sm:$0xff] %vm45, %v85
    %94 = vst.msk [vmem:[#allocation2 + $0xd0] sm:$0xff] %vm45, %v86
    %95 = vst.msk [vmem:[#allocation2 + $0xd8] sm:$0xff] %vm45, %v87
    %v96 = vmul.f32 %v79, %v79
    %v97 = vmul.f32 %v80, %v80
    %v98 = vmul.f32 %v81, %v81
    %v99 = vmul.f32 %v82, %v82
    %100 = vst.msk [vmem:[#allocation2 + $0xe0] sm:$0xff] %vm45, %v96
    %101 = vst.msk [vmem:[#allocation2 + $0xe8] sm:$0xff] %vm45, %v97
    %102 = vst.msk [vmem:[#allocation2 + $0xf0] sm:$0xff] %vm45, %v98
    %103 = vst.msk [vmem:[#allocation2 + $0xf8] sm:$0xff] %vm45, %v99
    %v104 = vmul.f32 %v84, %v84
    %v105 = vmul.f32 %v85, %v85
    %v106 = vmul.f32 %v86, %v86
    %v107 = vmul.f32 %v87, %v87
    %108 = vst.msk [vmem:[#allocation2 + $0x100] sm:$0xff] %vm45, %v104
    %109 = vst.msk [vmem:[#allocation2 + $0x108] sm:$0xff] %vm45, %v105
    %110 = vst.msk [vmem:[#allocation2 + $0x110] sm:$0xff] %vm45, %v106
    %111 = vst.msk [vmem:[#allocation2 + $0x118] sm:$0xff] %vm45, %v107
    %v112 = vmul.f32 %v79, %v84
    %v113 = vmul.f32 %v80, %v85
    %v114 = vmul.f32 %v81, %v86
    %v115 = vmul.f32 %v82, %v87
    %116 = vst.msk [vmem:[#allocation2 + $0x120] sm:$0xff] %vm45, %v112
    %117 = vst.msk [vmem:[#allocation2 + $0x128] sm:$0xff] %vm45, %v113
    %118 = vst.msk [vmem:[#allocation2 + $0x130] sm:$0xff] %vm45, %v114
    %119 = vst.msk [vmem:[#allocation2 + $0x138] sm:$0xff] %vm45, %v115
    %v120 = vld [vmem:[%s4] sm:$0xff]
    %v121 = vld [vmem:[%s4 + $0x8] sm:$0xff]
    %v122 = vld [vmem:[%s4 + $0x10] sm:$0xff]
    %v123 = vld [vmem:[%s4 + $0x18] sm:$0xff]
    %v124 = vld [vmem:[#allocation2] sm:$0xff]
    %v125 = vld [vmem:[#allocation2 + $0x8] sm:$0xff]
    %v126 = vld [vmem:[#allocation2 + $0x10] sm:$0xff]
    %v127 = vld [vmem:[#allocation2 + $0x18] sm:$0xff]
    %v128 = vld [vmem:[#allocation2 + $0x20] sm:$0xff]
    %v129 = vld [vmem:[#allocation2 + $0x28] sm:$0xff]
    %v130 = vld [vmem:[#allocation2 + $0x30] sm:$0xff]
    %v131 = vld [vmem:[#allocation2 + $0x38] sm:$0xff]
    %v132 = vld [vmem:[#allocation2 + $0x40] sm:$0xff]
    %v133 = vld [vmem:[#allocation2 + $0x48] sm:$0xff]
    %v134 = vld [vmem:[#allocation2 + $0x50] sm:$0xff]
    %v135 = vld [vmem:[#allocation2 + $0x58] sm:$0xff]
    %v136 = vld [vmem:[#allocation2 + $0x60] sm:$0xff]
    %v137 = vld [vmem:[#allocation2 + $0x68] sm:$0xff]
    %v138 = vld [vmem:[#allocation2 + $0x70] sm:$0xff]
    %v139 = vld [vmem:[#allocation2 + $0x78] sm:$0xff]
    %v140 = vld [vmem:[#allocation2 + $0x80] sm:$0xff]
    %v141 = vld [vmem:[#allocation2 + $0x88] sm:$0xff]
    %v142 = vld [vmem:[#allocation2 + $0x90] sm:$0xff]
    %v143 = vld [vmem:[#allocation2 + $0x98] sm:$0xff]
    %v144 = vld [vmem:[#allocation2 + $0xa0] sm:$0xff]
    %v145 = vld [vmem:[#allocation2 + $0xa8] sm:$0xff]
    %v146 = vld [vmem:[#allocation2 + $0xb0] sm:$0xff]
    %v147 = vld [vmem:[#allocation2 + $0xb8] sm:$0xff]
    %v148 = vld [vmem:[#allocation2 + $0xc0] sm:$0xff]
    %v149 = vld [vmem:[#allocation2 + $0xc8] sm:$0xff]
    %v150 = vld [vmem:[#allocation2 + $0xd0] sm:$0xff]
    %v151 = vld [vmem:[#allocation2 + $0xd8] sm:$0xff]
    %v152 = vld [vmem:[#allocation2 + $0xe0] sm:$0xff]
    %v153 = vld [vmem:[#allocation2 + $0xe8] sm:$0xff]
    %v154 = vld [vmem:[#allocation2 + $0xf0] sm:$0xff]
    %v155 = vld [vmem:[#allocation2 + $0xf8] sm:$0xff]
    %v156 = vld [vmem:[#allocation2 + $0x100] sm:$0xff]
    %v157 = vld [vmem:[#allocation2 + $0x108] sm:$0xff]
    %v158 = vld [vmem:[#allocation2 + $0x110] sm:$0xff]
    %v159 = vld [vmem:[#allocation2 + $0x118] sm:$0xff]
    %v160 = vld [vmem:[#allocation2 + $0x120] sm:$0xff]
    %v161 = vld [vmem:[#allocation2 + $0x128] sm:$0xff]
    %v162 = vld [vmem:[#allocation2 + $0x130] sm:$0xff]
    %v163 = vld [vmem:[#allocation2 + $0x138] sm:$0xff]
    %v165 = vsel %vm45, %v124, 0
    %v168 = vsel %vm45, %v125, 0
    %v171 = vsel %vm45, %v126, 0
    %v174 = vsel %vm45, %v127, 0
    %v177 = vsel %vm45, %v128, 0
    %v180 = vsel %vm45, %v129, 0
    %v183 = vsel %vm45, %v130, 0
    %v186 = vsel %vm45, %v131, 0
    %v189 = vsel %vm45, %v132, 0
    %v192 = vsel %vm45, %v133, 0
    %v195 = vsel %vm45, %v134, 0
    %v198 = vsel %vm45, %v135, 0
    %v201 = vsel %vm45, %v136, 0
    %v204 = vsel %vm45, %v137, 0
    %v207 = vsel %vm45, %v138, 0
    %v210 = vsel %vm45, %v139, 0
    %v213 = vsel %vm45, %v140, 0
    %v216 = vsel %vm45, %v141, 0
    %v219 = vsel %vm45, %v142, 0
    %v222 = vsel %vm45, %v143, 0
    %v225 = vsel %vm45, %v144, 0
    %v228 = vsel %vm45, %v145, 0
    %v231 = vsel %vm45, %v146, 0
    %v234 = vsel %vm45, %v147, 0
    %v237 = vsel %vm45, %v148, 0
    %v240 = vsel %vm45, %v149, 0
    %v243 = vsel %vm45, %v150, 0
    %v246 = vsel %vm45, %v151, 0
    %v249 = vsel %vm45, %v152, 0
    %v252 = vsel %vm45, %v153, 0
    %v255 = vsel %vm45, %v154, 0
    %v258 = vsel %vm45, %v155, 0
    %v261 = vsel %vm45, %v156, 0
    %v264 = vsel %vm45, %v157, 0
    %v267 = vsel %vm45, %v158, 0
    %v270 = vsel %vm45, %v159, 0
    %v273 = vsel %vm45, %v160, 0
    %v276 = vsel %vm45, %v161, 0
    %v279 = vsel %vm45, %v162, 0
    %v282 = vsel %vm45, %v163, 0
    %284 = vmatprep.subr.mxu0 0.0
    %285 = vmatpush1.msra.mxu0 0.0
    %286 = vmatprep.subr.mxu0 0.0
    %287 = vmatpush1.msra.mxu0 0.0
    %288 = vmatprep.subr.mxu0 0.0
    %289 = vmatpush1.msra.mxu0 0.0
    %290 = vmatprep.subr.mxu0 0.0
    %291 = vmatpush1.msra.mxu0 0.0
    %292 = vmatprep.subr.mxu0 0.0
    %293 = vmatpush1.msra.mxu0 0.0
    %294 = vmatprep.subr.mxu0 0.0
    %295 = vmatpush1.msra.mxu0 0.0
    %296 = vmatprep.subr.mxu0 0.0
    %297 = vmatpush1.msra.mxu0 0.0
    %298 = vmatprep.subr.mxu0 0.0
    %299 = vmatpush1.msra.mxu0 0.0
    %300 = vmatprep.subr.mxu0 0.0
    %301 = vmatpush1.msra.mxu0 0.0
    %302 = vmatprep.subr.mxu0 0.0
    %303 = vmatpush1.msra.mxu0 0.0
    %304 = vmatprep.subr.mxu0 0.0
    %305 = vmatpush1.msra.mxu0 0.0
    %306 = vmatprep.subr.mxu0 0.0
    %307 = vmatpush1.msra.mxu0 0.0
    %308 = vmatprep.subr.mxu0 0.0
    %309 = vmatpush1.msra.mxu0 %v123
    %310 = vmatprep.subr.mxu0 0.0
    %311 = vmatpush1.msra.mxu0 %v122
    %312 = vmatprep.subr.mxu0 0.0
    %313 = vmatpush1.msra.mxu0 %v121
    %314 = vmatprep.subr.mxu0 0.0
    %315 = vmatpush1.msra.mxu0 %v120
    %316 = vmatprep.subr.mxu0 0.0
    %317 = vmatpush2.msra.mxu0 0.0
    %318 = vmatprep.subr.mxu0 0.0
    %319 = vmatpush2.msra.mxu0 0.0
    %320 = vmatprep.subr.mxu0 0.0
    %321 = vmatpush2.msra.mxu0 0.0
    %322 = vmatprep.subr.mxu0 0.0
    %323 = vmatpush2.msra.mxu0 0.0
    %324 = vmatprep.subr.mxu0 0.0
    %325 = vmatpush2.msra.mxu0 0.0
    %326 = vmatprep.subr.mxu0 0.0
    %327 = vmatpush2.msra.mxu0 0.0
    %328 = vmatprep.subr.mxu0 0.0
    %329 = vmatpush2.msra.mxu0 0.0
    %330 = vmatprep.subr.mxu0 0.0
    %331 = vmatpush2.msra.mxu0 0.0
    %332 = vmatprep.subr.mxu0 0.0
    %333 = vmatpush2.msra.mxu0 0.0
    %334 = vmatprep.subr.mxu0 0.0
    %335 = vmatpush2.msra.mxu0 0.0
    %336 = vmatprep.subr.mxu0 0.0
    %337 = vmatpush2.msra.mxu0 0.0
    %338 = vmatprep.subr.mxu0 0.0
    %339 = vmatpush2.msra.mxu0 0.0
    %340 = vmatprep.subr.mxu0 0.0
    %341 = vmatpush2.msra.mxu0 0.0
    %342 = vmatprep.subr.mxu0 0.0
    %343 = vmatpush2.msra.mxu0 0.0
    %344 = vmatprep.subr.mxu0 0.0
    %345 = vmatpush2.msra.mxu0 0.0
    %346 = vmatprep.subr.mxu0 0.0
    %347 = vmatpush2.msra.mxu0 0.0
    %348 = vmatprep.mubr.f32.mxu0 0.0
    %349 = vmatmul.mubr.f32.gmra.mxu0 %v165
    %v350 = vpop.f32.mrf.mxu0
    %v351 = vadd.f32 0.0, %v350
    %v352 = vpop.f32.mrf.mxu0
    %353 = vmatprep.mubr.f32.mxu0 0.0
    %354 = vmatmul.mubr.f32.gmra.mxu0 %v168
    %v355 = vpop.f32.mrf.mxu0
    %v356 = vadd.f32 0.0, %v355
    %v357 = vpop.f32.mrf.mxu0
    %358 = vmatprep.mubr.f32.mxu0 0.0
    %359 = vmatmul.mubr.f32.gmra.mxu0 %v171
    %v360 = vpop.f32.mrf.mxu0
    %v361 = vadd.f32 0.0, %v360
    %v362 = vpop.f32.mrf.mxu0
    %363 = vmatprep.mubr.f32.mxu0 0.0
    %364 = vmatmul.mubr.f32.gmra.mxu0 %v174
    %v365 = vpop.f32.mrf.mxu0
    %v366 = vadd.f32 0.0, %v365
    %v367 = vpop.f32.mrf.mxu0
    %368 = vmatprep.mubr.f32.mxu0 0.0
    %369 = vmatmul.mubr.f32.gmra.mxu0 %v177
    %v370 = vpop.f32.mrf.mxu0
    %v371 = vadd.f32 0.0, %v370
    %v372 = vpop.f32.mrf.mxu0
    %373 = vmatprep.mubr.f32.mxu0 0.0
    %374 = vmatmul.mubr.f32.gmra.mxu0 %v180
    %v375 = vpop.f32.mrf.mxu0
    %v376 = vadd.f32 0.0, %v375
    %v377 = vpop.f32.mrf.mxu0
    %378 = vmatprep.mubr.f32.mxu0 0.0
    %379 = vmatmul.mubr.f32.gmra.mxu0 %v183
    %v380 = vpop.f32.mrf.mxu0
    %v381 = vadd.f32 0.0, %v380
    %v382 = vpop.f32.mrf.mxu0
    %383 = vmatprep.mubr.f32.mxu0 0.0
    %384 = vmatmul.mubr.f32.gmra.mxu0 %v186
    %v385 = vpop.f32.mrf.mxu0
    %v386 = vadd.f32 0.0, %v385
    %v387 = vpop.f32.mrf.mxu0
    %388 = vmatprep.mubr.f32.mxu0 0.0
    %389 = vmatmul.mubr.f32.gmra.mxu0 %v189
    %v390 = vpop.f32.mrf.mxu0
    %v391 = vadd.f32 0.0, %v390
    %v392 = vpop.f32.mrf.mxu0
    %393 = vmatprep.mubr.f32.mxu0 0.0
    %394 = vmatmul.mubr.f32.gmra.mxu0 %v192
    %v395 = vpop.f32.mrf.mxu0
    %v396 = vadd.f32 0.0, %v395
    %v397 = vpop.f32.mrf.mxu0
    %398 = vmatprep.mubr.f32.mxu0 0.0
    %399 = vmatmul.mubr.f32.gmra.mxu0 %v195
    %v400 = vpop.f32.mrf.mxu0
    %v401 = vadd.f32 0.0, %v400
    %v402 = vpop.f32.mrf.mxu0
    %403 = vmatprep.mubr.f32.mxu0 0.0
    %404 = vmatmul.mubr.f32.gmra.mxu0 %v198
    %v405 = vpop.f32.mrf.mxu0
    %v406 = vadd.f32 0.0, %v405
    %v407 = vpop.f32.mrf.mxu0
    %408 = vmatprep.mubr.f32.mxu0 0.0
    %409 = vmatmul.mubr.f32.gmra.mxu0 %v201
    %v410 = vpop.f32.mrf.mxu0
    %v411 = vadd.f32 0.0, %v410
    %v412 = vpop.f32.mrf.mxu0
    %413 = vmatprep.mubr.f32.mxu0 0.0
    %414 = vmatmul.mubr.f32.gmra.mxu0 %v204
    %v415 = vpop.f32.mrf.mxu0
    %v416 = vadd.f32 0.0, %v415
    %v417 = vpop.f32.mrf.mxu0
    %418 = vmatprep.mubr.f32.mxu0 0.0
    %419 = vmatmul.mubr.f32.gmra.mxu0 %v207
    %v420 = vpop.f32.mrf.mxu0
    %v421 = vadd.f32 0.0, %v420
    %v422 = vpop.f32.mrf.mxu0
    %423 = vmatprep.mubr.f32.mxu0 0.0
    %424 = vmatmul.mubr.f32.gmra.mxu0 %v210
    %v425 = vpop.f32.mrf.mxu0
    %v426 = vadd.f32 0.0, %v425
    %v427 = vpop.f32.mrf.mxu0
    %428 = vmatprep.mubr.f32.mxu0 0.0
    %429 = vmatmul.mubr.f32.gmra.mxu0 %v213
    %v430 = vpop.f32.mrf.mxu0
    %v431 = vadd.f32 0.0, %v430
    %v432 = vpop.f32.mrf.mxu0
    %433 = vmatprep.mubr.f32.mxu0 0.0
    %434 = vmatmul.mubr.f32.gmra.mxu0 %v216
    %v435 = vpop.f32.mrf.mxu0
    %v436 = vadd.f32 0.0, %v435
    %v437 = vpop.f32.mrf.mxu0
    %438 = vmatprep.mubr.f32.mxu0 0.0
    %439 = vmatmul.mubr.f32.gmra.mxu0 %v219
    %v440 = vpop.f32.mrf.mxu0
    %v441 = vadd.f32 0.0, %v440
    %v442 = vpop.f32.mrf.mxu0
    %443 = vmatprep.mubr.f32.mxu0 0.0
    %444 = vmatmul.mubr.f32.gmra.mxu0 %v222
    %v445 = vpop.f32.mrf.mxu0
    %v446 = vadd.f32 0.0, %v445
    %v447 = vpop.f32.mrf.mxu0
    %448 = vmatprep.mubr.f32.mxu0 0.0
    %449 = vmatmul.mubr.f32.gmra.mxu0 %v225
    %v450 = vpop.f32.mrf.mxu0
    %v451 = vadd.f32 0.0, %v450
    %v452 = vpop.f32.mrf.mxu0
    %453 = vmatprep.mubr.f32.mxu0 0.0
    %454 = vmatmul.mubr.f32.gmra.mxu0 %v228
    %v455 = vpop.f32.mrf.mxu0
    %v456 = vadd.f32 0.0, %v455
    %v457 = vpop.f32.mrf.mxu0
    %458 = vmatprep.mubr.f32.mxu0 0.0
    %459 = vmatmul.mubr.f32.gmra.mxu0 %v231
    %v460 = vpop.f32.mrf.mxu0
    %v461 = vadd.f32 0.0, %v460
    %v462 = vpop.f32.mrf.mxu0
    %463 = vmatprep.mubr.f32.mxu0 0.0
    %464 = vmatmul.mubr.f32.gmra.mxu0 %v234
    %v465 = vpop.f32.mrf.mxu0
    %v466 = vadd.f32 0.0, %v465
    %v467 = vpop.f32.mrf.mxu0
    %468 = vmatprep.mubr.f32.mxu0 0.0
    %469 = vmatmul.mubr.f32.gmra.mxu0 %v237
    %v470 = vpop.f32.mrf.mxu0
    %v471 = vadd.f32 0.0, %v470
    %v472 = vpop.f32.mrf.mxu0
    %473 = vmatprep.mubr.f32.mxu0 0.0
    %474 = vmatmul.mubr.f32.gmra.mxu0 %v240
    %v475 = vpop.f32.mrf.mxu0
    %v476 = vadd.f32 0.0, %v475
    %v477 = vpop.f32.mrf.mxu0
    %478 = vmatprep.mubr.f32.mxu0 0.0
    %479 = vmatmul.mubr.f32.gmra.mxu0 %v243
    %v480 = vpop.f32.mrf.mxu0
    %v481 = vadd.f32 0.0, %v480
    %v482 = vpop.f32.mrf.mxu0
    %483 = vmatprep.mubr.f32.mxu0 0.0
    %484 = vmatmul.mubr.f32.gmra.mxu0 %v246
    %v485 = vpop.f32.mrf.mxu0
    %v486 = vadd.f32 0.0, %v485
    %v487 = vpop.f32.mrf.mxu0
    %488 = vmatprep.mubr.f32.mxu0 0.0
    %489 = vmatmul.mubr.f32.gmra.mxu0 %v249
    %v490 = vpop.f32.mrf.mxu0
    %v491 = vadd.f32 0.0, %v490
    %v492 = vpop.f32.mrf.mxu0
    %493 = vmatprep.mubr.f32.mxu0 0.0
    %494 = vmatmul.mubr.f32.gmra.mxu0 %v252
    %v495 = vpop.f32.mrf.mxu0
    %v496 = vadd.f32 0.0, %v495
    %v497 = vpop.f32.mrf.mxu0
    %498 = vmatprep.mubr.f32.mxu0 0.0
    %499 = vmatmul.mubr.f32.gmra.mxu0 %v255
    %v500 = vpop.f32.mrf.mxu0
    %v501 = vadd.f32 0.0, %v500
    %v502 = vpop.f32.mrf.mxu0
    %503 = vmatprep.mubr.f32.mxu0 0.0
    %504 = vmatmul.mubr.f32.gmra.mxu0 %v258
    %v505 = vpop.f32.mrf.mxu0
    %v506 = vadd.f32 0.0, %v505
    %v507 = vpop.f32.mrf.mxu0
    %508 = vmatprep.mubr.f32.mxu0 0.0
    %509 = vmatmul.mubr.f32.gmra.mxu0 %v261
    %v510 = vpop.f32.mrf.mxu0
    %v511 = vadd.f32 0.0, %v510
    %v512 = vpop.f32.mrf.mxu0
    %513 = vmatprep.mubr.f32.mxu0 0.0
    %514 = vmatmul.mubr.f32.gmra.mxu0 %v264
    %v515 = vpop.f32.mrf.mxu0
    %v516 = vadd.f32 0.0, %v515
    %v517 = vpop.f32.mrf.mxu0
    %518 = vmatprep.mubr.f32.mxu0 0.0
    %519 = vmatmul.mubr.f32.gmra.mxu0 %v267
    %v520 = vpop.f32.mrf.mxu0
    %v521 = vadd.f32 0.0, %v520
    %v522 = vpop.f32.mrf.mxu0
    %523 = vmatprep.mubr.f32.mxu0 0.0
    %524 = vmatmul.mubr.f32.gmra.mxu0 %v270
    %v525 = vpop.f32.mrf.mxu0
    %v526 = vadd.f32 0.0, %v525
    %v527 = vpop.f32.mrf.mxu0
    %528 = vmatprep.mubr.f32.mxu0 0.0
    %529 = vmatmul.mubr.f32.gmra.mxu0 %v273
    %v530 = vpop.f32.mrf.mxu0
    %v531 = vadd.f32 0.0, %v530
    %v532 = vpop.f32.mrf.mxu0
    %533 = vmatprep.mubr.f32.mxu0 0.0
    %534 = vmatmul.mubr.f32.gmra.mxu0 %v276
    %v535 = vpop.f32.mrf.mxu0
    %v536 = vadd.f32 0.0, %v535
    %v537 = vpop.f32.mrf.mxu0
    %538 = vmatprep.mubr.f32.mxu0 0.0
    %539 = vmatmul.mubr.f32.gmra.mxu0 %v279
    %v540 = vpop.f32.mrf.mxu0
    %v541 = vadd.f32 0.0, %v540
    %v542 = vpop.f32.mrf.mxu0
    %543 = vmatprep.mubr.f32.mxu0 0.0
    %544 = vmatmul.mubr.f32.gmra.mxu0 %v282
    %v545 = vpop.f32.mrf.mxu0
    %v546 = vadd.f32 0.0, %v545
    %v547 = vpop.f32.mrf.mxu0
    %548 = vdwg.mxu0
    %v549 = vld [vmem:[%s3] sm:$0xff]
    %v550 = vld [vmem:[%s3 + $0x8] sm:$0xff]
    %v551 = vld [vmem:[%s3 + $0x10] sm:$0x3f]
    %v553 = vsel %vm45, %v549, 0
    %v556 = vsel %vm45, %v550, 0
    %v559 = vsel %vm45, %v551, 0
    %561 = vmatprep.subr.mxu0 0.0
    %562 = vmatpush1.msra.mxu0 0.0
    %563 = vmatprep.subr.mxu0 0.0
    %564 = vmatpush1.msra.mxu0 0.0
    %565 = vmatprep.subr.mxu0 0.0
    %566 = vmatpush1.msra.mxu0 0.0
    %567 = vmatprep.subr.mxu0 0.0
    %568 = vmatpush1.msra.mxu0 0.0
    %569 = vmatprep.subr.mxu0 0.0
    %570 = vmatpush1.msra.mxu0 0.0
    %571 = vmatprep.subr.mxu0 0.0
    %572 = vmatpush1.msra.mxu0 0.0
    %573 = vmatprep.subr.mxu0 0.0
    %574 = vmatpush1.msra.mxu0 0.0
    %575 = vmatprep.subr.mxu0 0.0
    %576 = vmatpush1.msra.mxu0 0.0
    %577 = vmatprep.subr.mxu0 0.0
    %578 = vmatpush1.msra.mxu0 0.0
    %579 = vmatprep.subr.mxu0 0.0
    %580 = vmatpush1.msra.mxu0 0.0
    %581 = vmatprep.subr.mxu0 0.0
    %582 = vmatpush1.msra.mxu0 0.0
    %583 = vmatprep.subr.mxu0 0.0
    %584 = vmatpush1.msra.mxu0 0.0
    %585 = vmatprep.subr.mxu0 0.0
    %586 = vmatpush1.msra.mxu0 %v366
    %587 = vmatprep.subr.mxu0 0.0
    %588 = vmatpush1.msra.mxu0 %v361
    %589 = vmatprep.subr.mxu0 0.0
    %590 = vmatpush1.msra.mxu0 %v356
    %591 = vmatprep.subr.mxu0 0.0
    %592 = vmatpush1.msra.mxu0 %v351
    %593 = vmatprep.subr.mxu0 0.0
    %594 = vmatpush2.msra.mxu0 0.0
    %595 = vmatprep.subr.mxu0 0.0
    %596 = vmatpush2.msra.mxu0 0.0
    %597 = vmatprep.subr.mxu0 0.0
    %598 = vmatpush2.msra.mxu0 0.0
    %599 = vmatprep.subr.mxu0 0.0
    %600 = vmatpush2.msra.mxu0 0.0
    %601 = vmatprep.subr.mxu0 0.0
    %602 = vmatpush2.msra.mxu0 0.0
    %603 = vmatprep.subr.mxu0 0.0
    %604 = vmatpush2.msra.mxu0 0.0
    %605 = vmatprep.subr.mxu0 0.0
    %606 = vmatpush2.msra.mxu0 0.0
    %607 = vmatprep.subr.mxu0 0.0
    %608 = vmatpush2.msra.mxu0 0.0
    %609 = vmatprep.subr.mxu0 0.0
    %610 = vmatpush2.msra.mxu0 0.0
    %611 = vmatprep.subr.mxu0 0.0
    %612 = vmatpush2.msra.mxu0 0.0
    %613 = vmatprep.subr.mxu0 0.0
    %614 = vmatpush2.msra.mxu0 0.0
    %615 = vmatprep.subr.mxu0 0.0
    %616 = vmatpush2.msra.mxu0 0.0
    %617 = vmatprep.subr.mxu0 0.0
    %618 = vmatpush2.msra.mxu0 0.0
    %619 = vmatprep.subr.mxu0 0.0
    %620 = vmatpush2.msra.mxu0 0.0
    %621 = vmatprep.subr.mxu0 0.0
    %622 = vmatpush2.msra.mxu0 0.0
    %623 = vmatprep.subr.mxu0 0.0
    %624 = vmatpush2.msra.mxu0 0.0
    %625 = vmatprep.mubr.f32.mxu0 0.0
    %626 = vmatmul.mubr.f32.gmra.mxu0 %v553
    %v627 = vpop.f32.mrf.mxu0
    %v628 = vadd.f32 0.0, %v627
    %v629 = vpop.f32.mrf.mxu0
    %630 = vmatprep.mubr.f32.mxu0 0.0
    %631 = vmatmul.mubr.f32.gmra.mxu0 %v556
    %v632 = vpop.f32.mrf.mxu0
    %v633 = vadd.f32 0.0, %v632
    %v634 = vpop.f32.mrf.mxu0
    %635 = vmatprep.mubr.f32.mxu0 0.0
    %636 = vmatmul.mubr.f32.gmra.mxu0 %v559
    %v637 = vpop.f32.mrf.mxu0
    %v638 = vadd.f32 0.0, %v637
    %v639 = vpop.f32.mrf.mxu0
    %640 = vdwg.mxu0
    %641 = vmatprep.subr.mxu0 0.0
    %642 = vmatpush1.msra.mxu0 0.0
    %643 = vmatprep.subr.mxu0 0.0
    %644 = vmatpush1.msra.mxu0 0.0
    %645 = vmatprep.subr.mxu0 0.0
    %646 = vmatpush1.msra.mxu0 0.0
    %647 = vmatprep.subr.mxu0 0.0
    %648 = vmatpush1.msra.mxu0 0.0
    %649 = vmatprep.subr.mxu0 0.0
    %650 = vmatpush1.msra.mxu0 0.0
    %651 = vmatprep.subr.mxu0 0.0
    %652 = vmatpush1.msra.mxu0 0.0
    %653 = vmatprep.subr.mxu0 0.0
    %654 = vmatpush1.msra.mxu0 0.0
    %655 = vmatprep.subr.mxu0 0.0
    %656 = vmatpush1.msra.mxu0 0.0
    %657 = vmatprep.subr.mxu0 0.0
    %658 = vmatpush1.msra.mxu0 0.0
    %659 = vmatprep.subr.mxu0 0.0
    %660 = vmatpush1.msra.mxu0 0.0
    %661 = vmatprep.subr.mxu0 0.0
    %662 = vmatpush1.msra.mxu0 0.0
    %663 = vmatprep.subr.mxu0 0.0
    %664 = vmatpush1.msra.mxu0 0.0
    %665 = vmatprep.subr.mxu0 0.0
    %666 = vmatpush1.msra.mxu0 %v386
    %667 = vmatprep.subr.mxu0 0.0
    %668 = vmatpush1.msra.mxu0 %v381
    %669 = vmatprep.subr.mxu0 0.0
    %670 = vmatpush1.msra.mxu0 %v376
    %671 = vmatprep.subr.mxu0 0.0
    %672 = vmatpush1.msra.mxu0 %v371
    %673 = vmatprep.subr.mxu0 0.0
    %674 = vmatpush2.msra.mxu0 0.0
    %675 = vmatprep.subr.mxu0 0.0
    %676 = vmatpush2.msra.mxu0 0.0
    %677 = vmatprep.subr.mxu0 0.0
    %678 = vmatpush2.msra.mxu0 0.0
    %679 = vmatprep.subr.mxu0 0.0
    %680 = vmatpush2.msra.mxu0 0.0
    %681 = vmatprep.subr.mxu0 0.0
    %682 = vmatpush2.msra.mxu0 0.0
    %683 = vmatprep.subr.mxu0 0.0
    %684 = vmatpush2.msra.mxu0 0.0
    %685 = vmatprep.subr.mxu0 0.0
    %686 = vmatpush2.msra.mxu0 0.0
    %687 = vmatprep.subr.mxu0 0.0
    %688 = vmatpush2.msra.mxu0 0.0
    %689 = vmatprep.subr.mxu0 0.0
    %690 = vmatpush2.msra.mxu0 0.0
    %691 = vmatprep.subr.mxu0 0.0
    %692 = vmatpush2.msra.mxu0 0.0
    %693 = vmatprep.subr.mxu0 0.0
    %694 = vmatpush2.msra.mxu0 0.0
    %695 = vmatprep.subr.mxu0 0.0
    %696 = vmatpush2.msra.mxu0 0.0
    %697 = vmatprep.subr.mxu0 0.0
    %698 = vmatpush2.msra.mxu0 0.0
    %699 = vmatprep.subr.mxu0 0.0
    %700 = vmatpush2.msra.mxu0 0.0
    %701 = vmatprep.subr.mxu0 0.0
    %702 = vmatpush2.msra.mxu0 0.0
    %703 = vmatprep.subr.mxu0 0.0
    %704 = vmatpush2.msra.mxu0 0.0
    %705 = vmatprep.mubr.f32.mxu0 0.0
    %706 = vmatmul.mubr.f32.gmra.mxu0 %v553
    %v707 = vpop.f32.mrf.mxu0
    %v708 = vadd.f32 0.0, %v707
    %v709 = vpop.f32.mrf.mxu0
    %710 = vmatprep.mubr.f32.mxu0 0.0
    %711 = vmatmul.mubr.f32.gmra.mxu0 %v556
    %v712 = vpop.f32.mrf.mxu0
    %v713 = vadd.f32 0.0, %v712
    %v714 = vpop.f32.mrf.mxu0
    %715 = vmatprep.mubr.f32.mxu0 0.0
    %716 = vmatmul.mubr.f32.gmra.mxu0 %v559
    %v717 = vpop.f32.mrf.mxu0
    %v718 = vadd.f32 0.0, %v717
    %v719 = vpop.f32.mrf.mxu0
    %720 = vdwg.mxu0
    %721 = vmatprep.subr.mxu0 0.0
    %722 = vmatpush1.msra.mxu0 0.0
    %723 = vmatprep.subr.mxu0 0.0
    %724 = vmatpush1.msra.mxu0 0.0
    %725 = vmatprep.subr.mxu0 0.0
    %726 = vmatpush1.msra.mxu0 0.0
    %727 = vmatprep.subr.mxu0 0.0
    %728 = vmatpush1.msra.mxu0 0.0
    %729 = vmatprep.subr.mxu0 0.0
    %730 = vmatpush1.msra.mxu0 0.0
    %731 = vmatprep.subr.mxu0 0.0
    %732 = vmatpush1.msra.mxu0 0.0
    %733 = vmatprep.subr.mxu0 0.0
    %734 = vmatpush1.msra.mxu0 0.0
    %735 = vmatprep.subr.mxu0 0.0
    %736 = vmatpush1.msra.mxu0 0.0
    %737 = vmatprep.subr.mxu0 0.0
    %738 = vmatpush1.msra.mxu0 0.0
    %739 = vmatprep.subr.mxu0 0.0
    %740 = vmatpush1.msra.mxu0 0.0
    %741 = vmatprep.subr.mxu0 0.0
    %742 = vmatpush1.msra.mxu0 0.0
    %743 = vmatprep.subr.mxu0 0.0
    %744 = vmatpush1.msra.mxu0 0.0
    %745 = vmatprep.subr.mxu0 0.0
    %746 = vmatpush1.msra.mxu0 %v406
    %747 = vmatprep.subr.mxu0 0.0
    %748 = vmatpush1.msra.mxu0 %v401
    %749 = vmatprep.subr.mxu0 0.0
    %750 = vmatpush1.msra.mxu0 %v396
    %751 = vmatprep.subr.mxu0 0.0
    %752 = vmatpush1.msra.mxu0 %v391
    %753 = vmatprep.subr.mxu0 0.0
    %754 = vmatpush2.msra.mxu0 0.0
    %755 = vmatprep.subr.mxu0 0.0
    %756 = vmatpush2.msra.mxu0 0.0
    %757 = vmatprep.subr.mxu0 0.0
    %758 = vmatpush2.msra.mxu0 0.0
    %759 = vmatprep.subr.mxu0 0.0
    %760 = vmatpush2.msra.mxu0 0.0
    %761 = vmatprep.subr.mxu0 0.0
    %762 = vmatpush2.msra.mxu0 0.0
    %763 = vmatprep.subr.mxu0 0.0
    %764 = vmatpush2.msra.mxu0 0.0
    %765 = vmatprep.subr.mxu0 0.0
    %766 = vmatpush2.msra.mxu0 0.0
    %767 = vmatprep.subr.mxu0 0.0
    %768 = vmatpush2.msra.mxu0 0.0
    %769 = vmatprep.subr.mxu0 0.0
    %770 = vmatpush2.msra.mxu0 0.0
    %771 = vmatprep.subr.mxu0 0.0
    %772 = vmatpush2.msra.mxu0 0.0
    %773 = vmatprep.subr.mxu0 0.0
    %774 = vmatpush2.msra.mxu0 0.0
    %775 = vmatprep.subr.mxu0 0.0
    %776 = vmatpush2.msra.mxu0 0.0
    %777 = vmatprep.subr.mxu0 0.0
    %778 = vmatpush2.msra.mxu0 0.0
    %779 = vmatprep.subr.mxu0 0.0
    %780 = vmatpush2.msra.mxu0 0.0
    %781 = vmatprep.subr.mxu0 0.0
    %782 = vmatpush2.msra.mxu0 0.0
    %783 = vmatprep.subr.mxu0 0.0
    %784 = vmatpush2.msra.mxu0 0.0
    %785 = vmatprep.mubr.f32.mxu0 0.0
    %786 = vmatmul.mubr.f32.gmra.mxu0 %v553
    %v787 = vpop.f32.mrf.mxu0
    %v788 = vadd.f32 0.0, %v787
    %v789 = vpop.f32.mrf.mxu0
    %790 = vmatprep.mubr.f32.mxu0 0.0
    %791 = vmatmul.mubr.f32.gmra.mxu0 %v556
    %v792 = vpop.f32.mrf.mxu0
    %v793 = vadd.f32 0.0, %v792
    %v794 = vpop.f32.mrf.mxu0
    %795 = vmatprep.mubr.f32.mxu0 0.0
    %796 = vmatmul.mubr.f32.gmra.mxu0 %v559
    %v797 = vpop.f32.mrf.mxu0
    %v798 = vadd.f32 0.0, %v797
    %v799 = vpop.f32.mrf.mxu0
    %800 = vdwg.mxu0
    %801 = vmatprep.subr.mxu0 0.0
    %802 = vmatpush1.msra.mxu0 0.0
    %803 = vmatprep.subr.mxu0 0.0
    %804 = vmatpush1.msra.mxu0 0.0
    %805 = vmatprep.subr.mxu0 0.0
    %806 = vmatpush1.msra.mxu0 0.0
    %807 = vmatprep.subr.mxu0 0.0
    %808 = vmatpush1.msra.mxu0 0.0
    %809 = vmatprep.subr.mxu0 0.0
    %810 = vmatpush1.msra.mxu0 0.0
    %811 = vmatprep.subr.mxu0 0.0
    %812 = vmatpush1.msra.mxu0 0.0
    %813 = vmatprep.subr.mxu0 0.0
    %814 = vmatpush1.msra.mxu0 0.0
    %815 = vmatprep.subr.mxu0 0.0
    %816 = vmatpush1.msra.mxu0 0.0
    %817 = vmatprep.subr.mxu0 0.0
    %818 = vmatpush1.msra.mxu0 0.0
    %819 = vmatprep.subr.mxu0 0.0
    %820 = vmatpush1.msra.mxu0 0.0
    %821 = vmatprep.subr.mxu0 0.0
    %822 = vmatpush1.msra.mxu0 0.0
    %823 = vmatprep.subr.mxu0 0.0
    %824 = vmatpush1.msra.mxu0 0.0
    %825 = vmatprep.subr.mxu0 0.0
    %826 = vmatpush1.msra.mxu0 %v426
    %827 = vmatprep.subr.mxu0 0.0
    %828 = vmatpush1.msra.mxu0 %v421
    %829 = vmatprep.subr.mxu0 0.0
    %830 = vmatpush1.msra.mxu0 %v416
    %831 = vmatprep.subr.mxu0 0.0
    %832 = vmatpush1.msra.mxu0 %v411
    %833 = vmatprep.subr.mxu0 0.0
    %834 = vmatpush2.msra.mxu0 0.0
    %835 = vmatprep.subr.mxu0 0.0
    %836 = vmatpush2.msra.mxu0 0.0
    %837 = vmatprep.subr.mxu0 0.0
    %838 = vmatpush2.msra.mxu0 0.0
    %839 = vmatprep.subr.mxu0 0.0
    %840 = vmatpush2.msra.mxu0 0.0
    %841 = vmatprep.subr.mxu0 0.0
    %842 = vmatpush2.msra.mxu0 0.0
    %843 = vmatprep.subr.mxu0 0.0
    %844 = vmatpush2.msra.mxu0 0.0
    %845 = vmatprep.subr.mxu0 0.0
    %846 = vmatpush2.msra.mxu0 0.0
    %847 = vmatprep.subr.mxu0 0.0
    %848 = vmatpush2.msra.mxu0 0.0
    %849 = vmatprep.subr.mxu0 0.0
    %850 = vmatpush2.msra.mxu0 0.0
    %851 = vmatprep.subr.mxu0 0.0
    %852 = vmatpush2.msra.mxu0 0.0
    %853 = vmatprep.subr.mxu0 0.0
    %854 = vmatpush2.msra.mxu0 0.0
    %855 = vmatprep.subr.mxu0 0.0
    %856 = vmatpush2.msra.mxu0 0.0
    %857 = vmatprep.subr.mxu0 0.0
    %858 = vmatpush2.msra.mxu0 0.0
    %859 = vmatprep.subr.mxu0 0.0
    %860 = vmatpush2.msra.mxu0 0.0
    %861 = vmatprep.subr.mxu0 0.0
    %862 = vmatpush2.msra.mxu0 0.0
    %863 = vmatprep.subr.mxu0 0.0
    %864 = vmatpush2.msra.mxu0 0.0
    %865 = vmatprep.mubr.f32.mxu0 0.0
    %866 = vmatmul.mubr.f32.gmra.mxu0 %v553
    %v867 = vpop.f32.mrf.mxu0
    %v868 = vadd.f32 0.0, %v867
    %v869 = vpop.f32.mrf.mxu0
    %870 = vmatprep.mubr.f32.mxu0 0.0
    %871 = vmatmul.mubr.f32.gmra.mxu0 %v556
    %v872 = vpop.f32.mrf.mxu0
    %v873 = vadd.f32 0.0, %v872
    %v874 = vpop.f32.mrf.mxu0
    %875 = vmatprep.mubr.f32.mxu0 0.0
    %876 = vmatmul.mubr.f32.gmra.mxu0 %v559
    %v877 = vpop.f32.mrf.mxu0
    %v878 = vadd.f32 0.0, %v877
    %v879 = vpop.f32.mrf.mxu0
    %880 = vdwg.mxu0
    %881 = vmatprep.subr.mxu0 0.0
    %882 = vmatpush1.msra.mxu0 0.0
    %883 = vmatprep.subr.mxu0 0.0
    %884 = vmatpush1.msra.mxu0 0.0
    %885 = vmatprep.subr.mxu0 0.0
    %886 = vmatpush1.msra.mxu0 0.0
    %887 = vmatprep.subr.mxu0 0.0
    %888 = vmatpush1.msra.mxu0 0.0
    %889 = vmatprep.subr.mxu0 0.0
    %890 = vmatpush1.msra.mxu0 0.0
    %891 = vmatprep.subr.mxu0 0.0
    %892 = vmatpush1.msra.mxu0 0.0
    %893 = vmatprep.subr.mxu0 0.0
    %894 = vmatpush1.msra.mxu0 0.0
    %895 = vmatprep.subr.mxu0 0.0
    %896 = vmatpush1.msra.mxu0 0.0
    %897 = vmatprep.subr.mxu0 0.0
    %898 = vmatpush1.msra.mxu0 0.0
    %899 = vmatprep.subr.mxu0 0.0
    %900 = vmatpush1.msra.mxu0 0.0
    %901 = vmatprep.subr.mxu0 0.0
    %902 = vmatpush1.msra.mxu0 0.0
    %903 = vmatprep.subr.mxu0 0.0
    %904 = vmatpush1.msra.mxu0 0.0
    %905 = vmatprep.subr.mxu0 0.0
    %906 = vmatpush1.msra.mxu0 %v446
    %907 = vmatprep.subr.mxu0 0.0
    %908 = vmatpush1.msra.mxu0 %v441
    %909 = vmatprep.subr.mxu0 0.0
    %910 = vmatpush1.msra.mxu0 %v436
    %911 = vmatprep.subr.mxu0 0.0
    %912 = vmatpush1.msra.mxu0 %v431
    %913 = vmatprep.subr.mxu0 0.0
    %914 = vmatpush2.msra.mxu0 0.0
    %915 = vmatprep.subr.mxu0 0.0
    %916 = vmatpush2.msra.mxu0 0.0
    %917 = vmatprep.subr.mxu0 0.0
    %918 = vmatpush2.msra.mxu0 0.0
    %919 = vmatprep.subr.mxu0 0.0
    %920 = vmatpush2.msra.mxu0 0.0
    %921 = vmatprep.subr.mxu0 0.0
    %922 = vmatpush2.msra.mxu0 0.0
    %923 = vmatprep.subr.mxu0 0.0
    %924 = vmatpush2.msra.mxu0 0.0
    %925 = vmatprep.subr.mxu0 0.0
    %926 = vmatpush2.msra.mxu0 0.0
    %927 = vmatprep.subr.mxu0 0.0
    %928 = vmatpush2.msra.mxu0 0.0
    %929 = vmatprep.subr.mxu0 0.0
    %930 = vmatpush2.msra.mxu0 0.0
    %931 = vmatprep.subr.mxu0 0.0
    %932 = vmatpush2.msra.mxu0 0.0
    %933 = vmatprep.subr.mxu0 0.0
    %934 = vmatpush2.msra.mxu0 0.0
    %935 = vmatprep.subr.mxu0 0.0
    %936 = vmatpush2.msra.mxu0 0.0
    %937 = vmatprep.subr.mxu0 0.0
    %938 = vmatpush2.msra.mxu0 0.0
    %939 = vmatprep.subr.mxu0 0.0
    %940 = vmatpush2.msra.mxu0 0.0
    %941 = vmatprep.subr.mxu0 0.0
    %942 = vmatpush2.msra.mxu0 0.0
    %943 = vmatprep.subr.mxu0 0.0
    %944 = vmatpush2.msra.mxu0 0.0
    %945 = vmatprep.mubr.f32.mxu0 0.0
    %946 = vmatmul.mubr.f32.gmra.mxu0 %v553
    %v947 = vpop.f32.mrf.mxu0
    %v948 = vadd.f32 0.0, %v947
    %v949 = vpop.f32.mrf.mxu0
    %950 = vmatprep.mubr.f32.mxu0 0.0
    %951 = vmatmul.mubr.f32.gmra.mxu0 %v556
    %v952 = vpop.f32.mrf.mxu0
    %v953 = vadd.f32 0.0, %v952
    %v954 = vpop.f32.mrf.mxu0
    %955 = vmatprep.mubr.f32.mxu0 0.0
    %956 = vmatmul.mubr.f32.gmra.mxu0 %v559
    %v957 = vpop.f32.mrf.mxu0
    %v958 = vadd.f32 0.0, %v957
    %v959 = vpop.f32.mrf.mxu0
    %960 = vdwg.mxu0
    %v961 = vmul.f32 %v628, %v628
    %v962 = vmul.f32 %v633, %v633
    %v963 = vmul.f32 %v638, %v638
    %v964 = vmul.f32 %v708, %v708
    %v965 = vmul.f32 %v713, %v713
    %v966 = vmul.f32 %v718, %v718
    %v967 = vmul.f32 %v628, %v708
    %v968 = vmul.f32 %v633, %v713
    %v969 = vmul.f32 %v638, %v718
    %v970 = vsub.f32 %v788, %v961
    %v971 = vsub.f32 %v793, %v962
    %v972 = vsub.f32 %v798, %v963
    %v973 = vsub.f32 %v868, %v964
    %v974 = vsub.f32 %v873, %v965
    %v975 = vsub.f32 %v878, %v966
    %v976 = vsub.f32 %v948, %v967
    %v977 = vsub.f32 %v953, %v968
    %v978 = vsub.f32 %v958, %v969
    %v979 = vmul.f32 %v967, 2.0
    %v980 = vmul.f32 %v968, 2.0
    %v981 = vmul.f32 %v969, 2.0
    %v982 = vstv %s34
    %v983 = vadd.f32 %v979, %v982
    %v984 = vadd.f32 %v980, %v982
    %v985 = vadd.f32 %v981, %v982
    %v986 = vmul.f32 %v976, 2.0
    %v987 = vmul.f32 %v977, 2.0
    %v988 = vmul.f32 %v978, 2.0
    %v989 = vstv %s35
    %v990 = vadd.f32 %v986, %v989
    %v991 = vadd.f32 %v987, %v989
    %v992 = vadd.f32 %v988, %v989
    %v993 = vmul.f32 %v983, %v990
    %v994 = vmul.f32 %v984, %v991
    %v995 = vmul.f32 %v985, %v992
    %v996 = vadd.f32 %v961, %v964
    %v997 = vadd.f32 %v962, %v965
    %v998 = vadd.f32 %v963, %v966
    %v999 = vadd.f32 %v996, %v982
    %v1000 = vadd.f32 %v997, %v982
    %v1001 = vadd.f32 %v998, %v982
    %v1002 = vadd.f32 %v970, %v973
    %v1003 = vadd.f32 %v971, %v974
    %v1004 = vadd.f32 %v972, %v975
    %v1005 = vadd.f32 %v1002, %v989
    %v1006 = vadd.f32 %v1003, %v989
    %v1007 = vadd.f32 %v1004, %v989
    %v1008 = vmul.f32 %v999, %v1005
    %v1009 = vmul.f32 %v1000, %v1006
    %v1010 = vmul.f32 %v1001, %v1007
    %v1011 = vrcp.pop %v1008
    %v1012 = vmul.f32 %v993, %v1011
    %v1013 = vrcp.pop %v1009
    %v1014 = vmul.f32 %v994, %v1013
    %v1015 = vrcp.pop %v1010
    %v1016 = vmul.f32 %v995, %v1015
    %vm1017 = vcmask 179200
    %v1018 = vsel %vm1017, %v1012, 0.0
    %v1019 = vsel %vm1017, %v1014, 0.0
    %v1020 = vadd.f32 %v1018, %v1019
    %vm1021 = vcmask 177152
    %v1022 = vsel %vm1021, %v1016, 0.0
    %v1023 = vadd.f32 %v1020, %v1022
    %1024 = vadd.xlane.f32.xlu0 %v1023
    %v1025 = vpop.xlane.xlu0 %1024
    %v1026 = vrot.slane %v1025, 4
    %v1027 = vadd.f32 %v1025, %v1026
    %v1028 = vrot.slane %v1027, 2
    %v1029 = vadd.f32 %v1027, %v1028
    %v1030 = vrot.slane %v1029, 1
    %v1031 = vadd.f32 %v1029, %v1030
    %s1032 = vtos %v1031
    %s1033 = smul.f32 %s1032, %s36
    %s1034 = scalar_lea.smem [#allocation6], 0
    %1035 = sst [smem:[%s1034]] %s1033
    %1036 = vmatprep.subr.mxu0 0.0
    %1037 = vmatpush1.msra.mxu0 0.0
    %1038 = vmatprep.subr.mxu0 0.0
    %1039 = vmatpush1.msra.mxu0 0.0
    %1040 = vmatprep.subr.mxu0 0.0
    %1041 = vmatpush1.msra.mxu0 0.0
    %1042 = vmatprep.subr.mxu0 0.0
    %1043 = vmatpush1.msra.mxu0 0.0
    %1044 = vmatprep.subr.mxu0 0.0
    %1045 = vmatpush1.msra.mxu0 0.0
    %1046 = vmatprep.subr.mxu0 0.0
    %1047 = vmatpush1.msra.mxu0 0.0
    %1048 = vmatprep.subr.mxu0 0.0
    %1049 = vmatpush1.msra.mxu0 0.0
    %1050 = vmatprep.subr.mxu0 0.0
    %1051 = vmatpush1.msra.mxu0 0.0
    %1052 = vmatprep.subr.mxu0 0.0
    %1053 = vmatpush1.msra.mxu0 0.0
    %1054 = vmatprep.subr.mxu0 0.0
    %1055 = vmatpush1.msra.mxu0 0.0
    %1056 = vmatprep.subr.mxu0 0.0
    %1057 = vmatpush1.msra.mxu0 0.0
    %1058 = vmatprep.subr.mxu0 0.0
    %1059 = vmatpush1.msra.mxu0 0.0
    %1060 = vmatprep.subr.mxu0 0.0
    %1061 = vmatpush1.msra.mxu0 %v466
    %1062 = vmatprep.subr.mxu0 0.0
    %1063 = vmatpush1.msra.mxu0 %v461
    %1064 = vmatprep.subr.mxu0 0.0
    %1065 = vmatpush1.msra.mxu0 %v456
    %1066 = vmatprep.subr.mxu0 0.0
    %1067 = vmatpush1.msra.mxu0 %v451
    %1068 = vmatprep.subr.mxu0 0.0
    %1069 = vmatpush2.msra.mxu0 0.0
    %1070 = vmatprep.subr.mxu0 0.0
    %1071 = vmatpush2.msra.mxu0 0.0
    %1072 = vmatprep.subr.mxu0 0.0
    %1073 = vmatpush2.msra.mxu0 0.0
    %1074 = vmatprep.subr.mxu0 0.0
    %1075 = vmatpush2.msra.mxu0 0.0
    %1076 = vmatprep.subr.mxu0 0.0
    %1077 = vmatpush2.msra.mxu0 0.0
    %1078 = vmatprep.subr.mxu0 0.0
    %1079 = vmatpush2.msra.mxu0 0.0
    %1080 = vmatprep.subr.mxu0 0.0
    %1081 = vmatpush2.msra.mxu0 0.0
    %1082 = vmatprep.subr.mxu0 0.0
    %1083 = vmatpush2.msra.mxu0 0.0
    %1084 = vmatprep.subr.mxu0 0.0
    %1085 = vmatpush2.msra.mxu0 0.0
    %1086 = vmatprep.subr.mxu0 0.0
    %1087 = vmatpush2.msra.mxu0 0.0
    %1088 = vmatprep.subr.mxu0 0.0
    %1089 = vmatpush2.msra.mxu0 0.0
    %1090 = vmatprep.subr.mxu0 0.0
    %1091 = vmatpush2.msra.mxu0 0.0
    %1092 = vmatprep.subr.mxu0 0.0
    %1093 = vmatpush2.msra.mxu0 0.0
    %1094 = vmatprep.subr.mxu0 0.0
    %1095 = vmatpush2.msra.mxu0 0.0
    %1096 = vmatprep.subr.mxu0 0.0
    %1097 = vmatpush2.msra.mxu0 0.0
    %1098 = vmatprep.subr.mxu0 0.0
    %1099 = vmatpush2.msra.mxu0 0.0
    %1100 = vmatprep.mubr.f32.mxu0 0.0
    %1101 = vmatmul.mubr.f32.gmra.mxu0 %v553
    %v1102 = vpop.f32.mrf.mxu0
    %v1103 = vadd.f32 0.0, %v1102
    %v1104 = vpop.f32.mrf.mxu0
    %1105 = vmatprep.mubr.f32.mxu0 0.0
    %1106 = vmatmul.mubr.f32.gmra.mxu0 %v556
    %v1107 = vpop.f32.mrf.mxu0
    %v1108 = vadd.f32 0.0, %v1107
    %v1109 = vpop.f32.mrf.mxu0
    %1110 = vmatprep.mubr.f32.mxu0 0.0
    %1111 = vmatmul.mubr.f32.gmra.mxu0 %v559
    %v1112 = vpop.f32.mrf.mxu0
    %v1113 = vadd.f32 0.0, %v1112
    %v1114 = vpop.f32.mrf.mxu0
    %1115 = vdwg.mxu0
    %1116 = vmatprep.subr.mxu0 0.0
    %1117 = vmatpush1.msra.mxu0 0.0
    %1118 = vmatprep.subr.mxu0 0.0
    %1119 = vmatpush1.msra.mxu0 0.0
    %1120 = vmatprep.subr.mxu0 0.0
    %1121 = vmatpush1.msra.mxu0 0.0
    %1122 = vmatprep.subr.mxu0 0.0
    %1123 = vmatpush1.msra.mxu0 0.0
    %1124 = vmatprep.subr.mxu0 0.0
    %1125 = vmatpush1.msra.mxu0 0.0
    %1126 = vmatprep.subr.mxu0 0.0
    %1127 = vmatpush1.msra.mxu0 0.0
    %1128 = vmatprep.subr.mxu0 0.0
    %1129 = vmatpush1.msra.mxu0 0.0
    %1130 = vmatprep.subr.mxu0 0.0
    %1131 = vmatpush1.msra.mxu0 0.0
    %1132 = vmatprep.subr.mxu0 0.0
    %1133 = vmatpush1.msra.mxu0 0.0
    %1134 = vmatprep.subr.mxu0 0.0
    %1135 = vmatpush1.msra.mxu0 0.0
    %1136 = vmatprep.subr.mxu0 0.0
    %1137 = vmatpush1.msra.mxu0 0.0
    %1138 = vmatprep.subr.mxu0 0.0
    %1139 = vmatpush1.msra.mxu0 0.0
    %1140 = vmatprep.subr.mxu0 0.0
    %1141 = vmatpush1.msra.mxu0 %v486
    %1142 = vmatprep.subr.mxu0 0.0
    %1143 = vmatpush1.msra.mxu0 %v481
    %1144 = vmatprep.subr.mxu0 0.0
    %1145 = vmatpush1.msra.mxu0 %v476
    %1146 = vmatprep.subr.mxu0 0.0
    %1147 = vmatpush1.msra.mxu0 %v471
    %1148 = vmatprep.subr.mxu0 0.0
    %1149 = vmatpush2.msra.mxu0 0.0
    %1150 = vmatprep.subr.mxu0 0.0
    %1151 = vmatpush2.msra.mxu0 0.0
    %1152 = vmatprep.subr.mxu0 0.0
    %1153 = vmatpush2.msra.mxu0 0.0
    %1154 = vmatprep.subr.mxu0 0.0
    %1155 = vmatpush2.msra.mxu0 0.0
    %1156 = vmatprep.subr.mxu0 0.0
    %1157 = vmatpush2.msra.mxu0 0.0
    %1158 = vmatprep.subr.mxu0 0.0
    %1159 = vmatpush2.msra.mxu0 0.0
    %1160 = vmatprep.subr.mxu0 0.0
    %1161 = vmatpush2.msra.mxu0 0.0
    %1162 = vmatprep.subr.mxu0 0.0
    %1163 = vmatpush2.msra.mxu0 0.0
    %1164 = vmatprep.subr.mxu0 0.0
    %1165 = vmatpush2.msra.mxu0 0.0
    %1166 = vmatprep.subr.mxu0 0.0
    %1167 = vmatpush2.msra.mxu0 0.0
    %1168 = vmatprep.subr.mxu0 0.0
    %1169 = vmatpush2.msra.mxu0 0.0
    %1170 = vmatprep.subr.mxu0 0.0
    %1171 = vmatpush2.msra.mxu0 0.0
    %1172 = vmatprep.subr.mxu0 0.0
    %1173 = vmatpush2.msra.mxu0 0.0
    %1174 = vmatprep.subr.mxu0 0.0
    %1175 = vmatpush2.msra.mxu0 0.0
    %1176 = vmatprep.subr.mxu0 0.0
    %1177 = vmatpush2.msra.mxu0 0.0
    %1178 = vmatprep.subr.mxu0 0.0
    %1179 = vmatpush2.msra.mxu0 0.0
    %1180 = vmatprep.mubr.f32.mxu0 0.0
    %1181 = vmatmul.mubr.f32.gmra.mxu0 %v553
    %v1182 = vpop.f32.mrf.mxu0
    %v1183 = vadd.f32 0.0, %v1182
    %v1184 = vpop.f32.mrf.mxu0
    %1185 = vmatprep.mubr.f32.mxu0 0.0
    %1186 = vmatmul.mubr.f32.gmra.mxu0 %v556
    %v1187 = vpop.f32.mrf.mxu0
    %v1188 = vadd.f32 0.0, %v1187
    %v1189 = vpop.f32.mrf.mxu0
    %1190 = vmatprep.mubr.f32.mxu0 0.0
    %1191 = vmatmul.mubr.f32.gmra.mxu0 %v559
    %v1192 = vpop.f32.mrf.mxu0
    %v1193 = vadd.f32 0.0, %v1192
    %v1194 = vpop.f32.mrf.mxu0
    %1195 = vdwg.mxu0
    %1196 = vmatprep.subr.mxu0 0.0
    %1197 = vmatpush1.msra.mxu0 0.0
    %1198 = vmatprep.subr.mxu0 0.0
    %1199 = vmatpush1.msra.mxu0 0.0
    %1200 = vmatprep.subr.mxu0 0.0
    %1201 = vmatpush1.msra.mxu0 0.0
    %1202 = vmatprep.subr.mxu0 0.0
    %1203 = vmatpush1.msra.mxu0 0.0
    %1204 = vmatprep.subr.mxu0 0.0
    %1205 = vmatpush1.msra.mxu0 0.0
    %1206 = vmatprep.subr.mxu0 0.0
    %1207 = vmatpush1.msra.mxu0 0.0
    %1208 = vmatprep.subr.mxu0 0.0
    %1209 = vmatpush1.msra.mxu0 0.0
    %1210 = vmatprep.subr.mxu0 0.0
    %1211 = vmatpush1.msra.mxu0 0.0
    %1212 = vmatprep.subr.mxu0 0.0
    %1213 = vmatpush1.msra.mxu0 0.0
    %1214 = vmatprep.subr.mxu0 0.0
    %1215 = vmatpush1.msra.mxu0 0.0
    %1216 = vmatprep.subr.mxu0 0.0
    %1217 = vmatpush1.msra.mxu0 0.0
    %1218 = vmatprep.subr.mxu0 0.0
    %1219 = vmatpush1.msra.mxu0 0.0
    %1220 = vmatprep.subr.mxu0 0.0
    %1221 = vmatpush1.msra.mxu0 %v506
    %1222 = vmatprep.subr.mxu0 0.0
    %1223 = vmatpush1.msra.mxu0 %v501
    %1224 = vmatprep.subr.mxu0 0.0
    %1225 = vmatpush1.msra.mxu0 %v496
    %1226 = vmatprep.subr.mxu0 0.0
    %1227 = vmatpush1.msra.mxu0 %v491
    %1228 = vmatprep.subr.mxu0 0.0
    %1229 = vmatpush2.msra.mxu0 0.0
    %1230 = vmatprep.subr.mxu0 0.0
    %1231 = vmatpush2.msra.mxu0 0.0
    %1232 = vmatprep.subr.mxu0 0.0
    %1233 = vmatpush2.msra.mxu0 0.0
    %1234 = vmatprep.subr.mxu0 0.0
    %1235 = vmatpush2.msra.mxu0 0.0
    %1236 = vmatprep.subr.mxu0 0.0
    %1237 = vmatpush2.msra.mxu0 0.0
    %1238 = vmatprep.subr.mxu0 0.0
    %1239 = vmatpush2.msra.mxu0 0.0
    %1240 = vmatprep.subr.mxu0 0.0
    %1241 = vmatpush2.msra.mxu0 0.0
    %1242 = vmatprep.subr.mxu0 0.0
    %1243 = vmatpush2.msra.mxu0 0.0
    %1244 = vmatprep.subr.mxu0 0.0
    %1245 = vmatpush2.msra.mxu0 0.0
    %1246 = vmatprep.subr.mxu0 0.0
    %1247 = vmatpush2.msra.mxu0 0.0
    %1248 = vmatprep.subr.mxu0 0.0
    %1249 = vmatpush2.msra.mxu0 0.0
    %1250 = vmatprep.subr.mxu0 0.0
    %1251 = vmatpush2.msra.mxu0 0.0
    %1252 = vmatprep.subr.mxu0 0.0
    %1253 = vmatpush2.msra.mxu0 0.0
    %1254 = vmatprep.subr.mxu0 0.0
    %1255 = vmatpush2.msra.mxu0 0.0
    %1256 = vmatprep.subr.mxu0 0.0
    %1257 = vmatpush2.msra.mxu0 0.0
    %1258 = vmatprep.subr.mxu0 0.0
    %1259 = vmatpush2.msra.mxu0 0.0
    %1260 = vmatprep.mubr.f32.mxu0 0.0
    %1261 = vmatmul.mubr.f32.gmra.mxu0 %v553
    %v1262 = vpop.f32.mrf.mxu0
    %v1263 = vadd.f32 0.0, %v1262
    %v1264 = vpop.f32.mrf.mxu0
    %1265 = vmatprep.mubr.f32.mxu0 0.0
    %1266 = vmatmul.mubr.f32.gmra.mxu0 %v556
    %v1267 = vpop.f32.mrf.mxu0
    %v1268 = vadd.f32 0.0, %v1267
    %v1269 = vpop.f32.mrf.mxu0
    %1270 = vmatprep.mubr.f32.mxu0 0.0
    %1271 = vmatmul.mubr.f32.gmra.mxu0 %v559
    %v1272 = vpop.f32.mrf.mxu0
    %v1273 = vadd.f32 0.0, %v1272
    %v1274 = vpop.f32.mrf.mxu0
    %1275 = vdwg.mxu0
    %1276 = vmatprep.subr.mxu0 0.0
    %1277 = vmatpush1.msra.mxu0 0.0
    %1278 = vmatprep.subr.mxu0 0.0
    %1279 = vmatpush1.msra.mxu0 0.0
    %1280 = vmatprep.subr.mxu0 0.0
    %1281 = vmatpush1.msra.mxu0 0.0
    %1282 = vmatprep.subr.mxu0 0.0
    %1283 = vmatpush1.msra.mxu0 0.0
    %1284 = vmatprep.subr.mxu0 0.0
    %1285 = vmatpush1.msra.mxu0 0.0
    %1286 = vmatprep.subr.mxu0 0.0
    %1287 = vmatpush1.msra.mxu0 0.0
    %1288 = vmatprep.subr.mxu0 0.0
    %1289 = vmatpush1.msra.mxu0 0.0
    %1290 = vmatprep.subr.mxu0 0.0
    %1291 = vmatpush1.msra.mxu0 0.0
    %1292 = vmatprep.subr.mxu0 0.0
    %1293 = vmatpush1.msra.mxu0 0.0
    %1294 = vmatprep.subr.mxu0 0.0
    %1295 = vmatpush1.msra.mxu0 0.0
    %1296 = vmatprep.subr.mxu0 0.0
    %1297 = vmatpush1.msra.mxu0 0.0
    %1298 = vmatprep.subr.mxu0 0.0
    %1299 = vmatpush1.msra.mxu0 0.0
    %1300 = vmatprep.subr.mxu0 0.0
    %1301 = vmatpush1.msra.mxu0 %v526
    %1302 = vmatprep.subr.mxu0 0.0
    %1303 = vmatpush1.msra.mxu0 %v521
    %1304 = vmatprep.subr.mxu0 0.0
    %1305 = vmatpush1.msra.mxu0 %v516
    %1306 = vmatprep.subr.mxu0 0.0
    %1307 = vmatpush1.msra.mxu0 %v511
    %1308 = vmatprep.subr.mxu0 0.0
    %1309 = vmatpush2.msra.mxu0 0.0
    %1310 = vmatprep.subr.mxu0 0.0
    %1311 = vmatpush2.msra.mxu0 0.0
    %1312 = vmatprep.subr.mxu0 0.0
    %1313 = vmatpush2.msra.mxu0 0.0
    %1314 = vmatprep.subr.mxu0 0.0
    %1315 = vmatpush2.msra.mxu0 0.0
    %1316 = vmatprep.subr.mxu0 0.0
    %1317 = vmatpush2.msra.mxu0 0.0
    %1318 = vmatprep.subr.mxu0 0.0
    %1319 = vmatpush2.msra.mxu0 0.0
    %1320 = vmatprep.subr.mxu0 0.0
    %1321 = vmatpush2.msra.mxu0 0.0
    %1322 = vmatprep.subr.mxu0 0.0
    %1323 = vmatpush2.msra.mxu0 0.0
    %1324 = vmatprep.subr.mxu0 0.0
    %1325 = vmatpush2.msra.mxu0 0.0
    %1326 = vmatprep.subr.mxu0 0.0
    %1327 = vmatpush2.msra.mxu0 0.0
    %1328 = vmatprep.subr.mxu0 0.0
    %1329 = vmatpush2.msra.mxu0 0.0
    %1330 = vmatprep.subr.mxu0 0.0
    %1331 = vmatpush2.msra.mxu0 0.0
    %1332 = vmatprep.subr.mxu0 0.0
    %1333 = vmatpush2.msra.mxu0 0.0
    %1334 = vmatprep.subr.mxu0 0.0
    %1335 = vmatpush2.msra.mxu0 0.0
    %1336 = vmatprep.subr.mxu0 0.0
    %1337 = vmatpush2.msra.mxu0 0.0
    %1338 = vmatprep.subr.mxu0 0.0
    %1339 = vmatpush2.msra.mxu0 0.0
    %1340 = vmatprep.mubr.f32.mxu0 0.0
    %1341 = vmatmul.mubr.f32.gmra.mxu0 %v553
    %v1342 = vpop.f32.mrf.mxu0
    %v1343 = vadd.f32 0.0, %v1342
    %v1344 = vpop.f32.mrf.mxu0
    %1345 = vmatprep.mubr.f32.mxu0 0.0
    %1346 = vmatmul.mubr.f32.gmra.mxu0 %v556
    %v1347 = vpop.f32.mrf.mxu0
    %v1348 = vadd.f32 0.0, %v1347
    %v1349 = vpop.f32.mrf.mxu0
    %1350 = vmatprep.mubr.f32.mxu0 0.0
    %1351 = vmatmul.mubr.f32.gmra.mxu0 %v559
    %v1352 = vpop.f32.mrf.mxu0
    %v1353 = vadd.f32 0.0, %v1352
    %v1354 = vpop.f32.mrf.mxu0
    %1355 = vdwg.mxu0
    %1356 = vmatprep.subr.mxu0 0.0
    %1357 = vmatpush1.msra.mxu0 0.0
    %1358 = vmatprep.subr.mxu0 0.0
    %1359 = vmatpush1.msra.mxu0 0.0
    %1360 = vmatprep.subr.mxu0 0.0
    %1361 = vmatpush1.msra.mxu0 0.0
    %1362 = vmatprep.subr.mxu0 0.0
    %1363 = vmatpush1.msra.mxu0 0.0
    %1364 = vmatprep.subr.mxu0 0.0
    %1365 = vmatpush1.msra.mxu0 0.0
    %1366 = vmatprep.subr.mxu0 0.0
    %1367 = vmatpush1.msra.mxu0 0.0
    %1368 = vmatprep.subr.mxu0 0.0
    %1369 = vmatpush1.msra.mxu0 0.0
    %1370 = vmatprep.subr.mxu0 0.0
    %1371 = vmatpush1.msra.mxu0 0.0
    %1372 = vmatprep.subr.mxu0 0.0
    %1373 = vmatpush1.msra.mxu0 0.0
    %1374 = vmatprep.subr.mxu0 0.0
    %1375 = vmatpush1.msra.mxu0 0.0
    %1376 = vmatprep.subr.mxu0 0.0
    %1377 = vmatpush1.msra.mxu0 0.0
    %1378 = vmatprep.subr.mxu0 0.0
    %1379 = vmatpush1.msra.mxu0 0.0
    %1380 = vmatprep.subr.mxu0 0.0
    %1381 = vmatpush1.msra.mxu0 %v546
    %1382 = vmatprep.subr.mxu0 0.0
    %1383 = vmatpush1.msra.mxu0 %v541
    %1384 = vmatprep.subr.mxu0 0.0
    %1385 = vmatpush1.msra.mxu0 %v536
    %1386 = vmatprep.subr.mxu0 0.0
    %1387 = vmatpush1.msra.mxu0 %v531
    %1388 = vmatprep.subr.mxu0 0.0
    %1389 = vmatpush2.msra.mxu0 0.0
    %1390 = vmatprep.subr.mxu0 0.0
    %1391 = vmatpush2.msra.mxu0 0.0
    %1392 = vmatprep.subr.mxu0 0.0
    %1393 = vmatpush2.msra.mxu0 0.0
    %1394 = vmatprep.subr.mxu0 0.0
    %1395 = vmatpush2.msra.mxu0 0.0
    %1396 = vmatprep.subr.mxu0 0.0
    %1397 = vmatpush2.msra.mxu0 0.0
    %1398 = vmatprep.subr.mxu0 0.0
    %1399 = vmatpush2.msra.mxu0 0.0
    %1400 = vmatprep.subr.mxu0 0.0
    %1401 = vmatpush2.msra.mxu0 0.0
    %1402 = vmatprep.subr.mxu0 0.0
    %1403 = vmatpush2.msra.mxu0 0.0
    %1404 = vmatprep.subr.mxu0 0.0
    %1405 = vmatpush2.msra.mxu0 0.0
    %1406 = vmatprep.subr.mxu0 0.0
    %1407 = vmatpush2.msra.mxu0 0.0
    %1408 = vmatprep.subr.mxu0 0.0
    %1409 = vmatpush2.msra.mxu0 0.0
    %1410 = vmatprep.subr.mxu0 0.0
    %1411 = vmatpush2.msra.mxu0 0.0
    %1412 = vmatprep.subr.mxu0 0.0
    %1413 = vmatpush2.msra.mxu0 0.0
    %1414 = vmatprep.subr.mxu0 0.0
    %1415 = vmatpush2.msra.mxu0 0.0
    %1416 = vmatprep.subr.mxu0 0.0
    %1417 = vmatpush2.msra.mxu0 0.0
    %1418 = vmatprep.subr.mxu0 0.0
    %1419 = vmatpush2.msra.mxu0 0.0
    %1420 = vmatprep.mubr.f32.mxu0 0.0
    %1421 = vmatmul.mubr.f32.gmra.mxu0 %v553
    %v1422 = vpop.f32.mrf.mxu0
    %v1423 = vadd.f32 0.0, %v1422
    %v1424 = vpop.f32.mrf.mxu0
    %1425 = vmatprep.mubr.f32.mxu0 0.0
    %1426 = vmatmul.mubr.f32.gmra.mxu0 %v556
    %v1427 = vpop.f32.mrf.mxu0
    %v1428 = vadd.f32 0.0, %v1427
    %v1429 = vpop.f32.mrf.mxu0
    %1430 = vmatprep.mubr.f32.mxu0 0.0
    %1431 = vmatmul.mubr.f32.gmra.mxu0 %v559
    %v1432 = vpop.f32.mrf.mxu0
    %v1433 = vadd.f32 0.0, %v1432
    %v1434 = vpop.f32.mrf.mxu0
    %1435 = vdwg.mxu0
    %v1436 = vmul.f32 %v1103, %v1103
    %v1437 = vmul.f32 %v1108, %v1108
    %v1438 = vmul.f32 %v1113, %v1113
    %v1439 = vmul.f32 %v1183, %v1183
    %v1440 = vmul.f32 %v1188, %v1188
    %v1441 = vmul.f32 %v1193, %v1193
    %v1442 = vmul.f32 %v1103, %v1183
    %v1443 = vmul.f32 %v1108, %v1188
    %v1444 = vmul.f32 %v1113, %v1193
    %v1445 = vsub.f32 %v1263, %v1436
    %v1446 = vsub.f32 %v1268, %v1437
    %v1447 = vsub.f32 %v1273, %v1438
    %v1448 = vsub.f32 %v1343, %v1439
    %v1449 = vsub.f32 %v1348, %v1440
    %v1450 = vsub.f32 %v1353, %v1441
    %v1451 = vsub.f32 %v1423, %v1442
    %v1452 = vsub.f32 %v1428, %v1443
    %v1453 = vsub.f32 %v1433, %v1444
    %v1454 = vmul.f32 %v1442, 2.0
    %v1455 = vmul.f32 %v1443, 2.0
    %v1456 = vmul.f32 %v1444, 2.0
    %v1457 = vadd.f32 %v1454, %v982
    %v1458 = vadd.f32 %v1455, %v982
    %v1459 = vadd.f32 %v1456, %v982
    %v1460 = vmul.f32 %v1451, 2.0
    %v1461 = vmul.f32 %v1452, 2.0
    %v1462 = vmul.f32 %v1453, 2.0
    %v1463 = vadd.f32 %v1460, %v989
    %v1464 = vadd.f32 %v1461, %v989
    %v1465 = vadd.f32 %v1462, %v989
    %v1466 = vmul.f32 %v1457, %v1463
    %v1467 = vmul.f32 %v1458, %v1464
    %v1468 = vmul.f32 %v1459, %v1465
    %v1469 = vadd.f32 %v1436, %v1439
    %v1470 = vadd.f32 %v1437, %v1440
    %v1471 = vadd.f32 %v1438, %v1441
    %v1472 = vadd.f32 %v1469, %v982
    %v1473 = vadd.f32 %v1470, %v982
    %v1474 = vadd.f32 %v1471, %v982
    %v1475 = vadd.f32 %v1445, %v1448
    %v1476 = vadd.f32 %v1446, %v1449
    %v1477 = vadd.f32 %v1447, %v1450
    %v1478 = vadd.f32 %v1475, %v989
    %v1479 = vadd.f32 %v1476, %v989
    %v1480 = vadd.f32 %v1477, %v989
    %v1481 = vmul.f32 %v1472, %v1478
    %v1482 = vmul.f32 %v1473, %v1479
    %v1483 = vmul.f32 %v1474, %v1480
    %v1484 = vrcp.pop %v1481
    %v1485 = vmul.f32 %v1466, %v1484
    %v1486 = vrcp.pop %v1482
    %v1487 = vmul.f32 %v1467, %v1486
    %v1488 = vrcp.pop %v1483
    %v1489 = vmul.f32 %v1468, %v1488
    %v1490 = vsel %vm1017, %v1485, 0.0
    %v1491 = vsel %vm1017, %v1487, 0.0
    %v1492 = vadd.f32 %v1490, %v1491
    %v1493 = vsel %vm1021, %v1489, 0.0
    %v1494 = vadd.f32 %v1492, %v1493
    %1495 = vadd.xlane.f32.xlu0 %v1494
    %v1496 = vpop.xlane.xlu0 %1495
    %v1497 = vrot.slane %v1496, 4
    %v1498 = vadd.f32 %v1496, %v1497
    %v1499 = vrot.slane %v1498, 2
    %v1500 = vadd.f32 %v1498, %v1499
    %v1501 = vrot.slane %v1500, 1
    %v1502 = vadd.f32 %v1500, %v1501
    %s1503 = vtos %v1502
    %s1504 = smul.f32 %s1503, %s36
    %s1505 = scalar_lea.smem [#allocation6], 128
    %1506 = sst [smem:[%s1505]] %s1504
    // Predicated region
    $region26: #{masked_ssim.1} parent=1 // pred_check
      _
    $region27: #{masked_ssim.1} parent=1 // pred_check_branch
      %1508 = sbr.rel (0) target = $region29
    $region28: #{masked_ssim.1} parent=1 // pred_region
      %s1510 = ssub.s32 32, 32
      %1511 = vsyncadd [#allocation5], %s1510
      %s1513 = sshll.u32 %s5, 4
      %s1514 = int_to_ptr.vmem [resolvable:$true] %s1513
      %1516 = dma.smem_to_vmem [#allocation6], 32, %s1514, [#allocation5]
    $region29: #{masked_ssim.1} parent=1 // pred_fallthru
      _
    // Predicated region
    $region30: #{masked_ssim.1} parent=1 // pred_check
      _
    $region31: #{masked_ssim.1} parent=1 // pred_check_branch
      %1518 = sbr.rel (0) target = $region33
    $region32: #{masked_ssim.1} parent=1 // pred_region
      %1519 = dma.done [#allocation5], 32
    $region33: #{masked_ssim.1} parent=1 // pred_fallthru
      _
    %1520 = sfence
    %1521 = vsyncpa [#allocation4], 1
    %1522 = vsyncpa [#allocation5], 1

</llo_original>
